<compile_context>
chip_gen: v6e
topology: v6e:2x2x1
jax: 0.10.0
libtpu: 0.0.40
codegen_flags: <defaults>
</compile_context>

<pallas_src>
import functools

import jax
import jax.numpy as jnp
from jax.experimental import pallas as pl
from jax.experimental.pallas import tpu as pltpu

BN_EPS = 1e-5
L2_EPS = 1e-12
VMEM_LIMIT = 48 * 1024 * 1024   # <= v7x physical 64 MiB; plenty for these blocks


def _round_up(v, m):
    return (v + m - 1) // m * m


def _pad_last(a, target):
    pad = target - a.shape[-1]
    if pad == 0:
        return a
    widths = [(0, 0)] * (a.ndim - 1) + [(0, pad)]
    return jnp.pad(a, widths)


# ---------------------------------------------------------------------------
# Kernel A: down_channel = 1x1 Conv (no bias) + BatchNorm2d(eval) + ReLU,
#           fused with per-frame stripe pooling (p stripes per frame).
#           Input stays in its native (frame, C, W*H) layout; the channel
#           contraction is done in-kernel (no HBM transpose), bf16 MXU feed.
# ---------------------------------------------------------------------------
def down_channel_kernel(x_ref, w_ref, scale_ref, shift_ref, out_ref,
                        *, p, stripe_len):
    w = w_ref[...]                               # (C, Cout) bf16
    scale = scale_ref[...]                       # (1, Cout) f32
    shift = shift_ref[...]                       # (1, Cout) f32
    bf = x_ref.shape[0]
    pooled = []
    for f in range(bf):                          # static unroll over frames
        xf = x_ref[f]                            # (C, S) bf16
        # contract over C: (S, C) @ (C, Cout) with transposed LHS (MXU-native)
        y = jax.lax.dot_general(xf, w, (((0,), (0,)), ((), ())),
                                preferred_element_type=jnp.float32)  # (S, Cout)
        y = jnp.maximum(y * scale + shift, 0.0)  # BN (eval, folded) + ReLU
        # stripe pooling: reshape + mean (VPU/XLU), no pooling matmul
        y = y.reshape(p, stripe_len, y.shape[-1])
        pooled.append(jnp.mean(y, axis=1))       # (p, Cout)
    out_ref[...] = jnp.stack(pooled, axis=0)     # (BF, p, Cout)


def down_channel(x_f, w_dc, bn_scale, bn_shift, *, p, stripe_len, bf):
    bt, c, s = x_f.shape
    cout = w_dc.shape[1]
    assert bt % bf == 0
    kernel = functools.partial(down_channel_kernel, p=p, stripe_len=stripe_len)
    return pl.pallas_call(
        kernel,
        out_shape=jax.ShapeDtypeStruct((bt, p, cout), jnp.float32),
        grid=(bt // bf,),
        in_specs=[
            pl.BlockSpec((bf, c, s), lambda i: (i, 0, 0)),
            pl.BlockSpec((c, cout), lambda i: (0, 0)),
            pl.BlockSpec((1, cout), lambda i: (0, 0)),
            pl.BlockSpec((1, cout), lambda i: (0, 0)),
        ],
        out_specs=pl.BlockSpec((bf, p, cout), lambda i: (i, 0, 0)),
        compiler_params=pltpu.CompilerParams(
            dimension_semantics=("parallel",),
            vmem_limit_bytes=VMEM_LIMIT),
    )(x_f, w_dc, bn_scale, bn_shift)


# ---------------------------------------------------------------------------
# Kernel B (fused): 3x BatchedGraphSAGEDynamicRangeMean1 (shared weights, as
# in the reference's chained os_conv_layer1 reuse) + feature stacking means
# + 3x (bottleneck BatchNorm1d(eval) + Linear classifier).  Batched over BB
# batch elements per grid step; the GraphSAGE state is carried as two halves
# so no per-layer concatenate is materialized.
# ---------------------------------------------------------------------------
def fused_graph_heads_kernel(nodes_ref, wx_ref, bx_ref, wn_ref, bnb_ref,
                             gsc_ref, gsh_ref, bts_ref, btb_ref,
                             wc_ref, bc_ref, bn_out_ref, cls_ref,
                             *, p, t_range, kn, dout, dpad):
    x0 = nodes_ref[...]                          # (BB, N, 2*dout) f32
    bb, n_nodes, _ = x0.shape
    NEG = jnp.float32(-1e30)

    # hoisted iotas / temporal band mask (shared by all layers & rounds)
    col_ids = jax.lax.broadcasted_iota(jnp.int32, (n_nodes, n_nodes), 1)
    row_ids = jax.lax.broadcasted_iota(jnp.int32, (n_nodes, n_nodes), 0)
    band = jnp.abs(col_ids // p - row_ids // p) <= t_range

    # weight halves (static, aligned slices at real dims)
    wx = wx_ref[...]                             # (2*dout, dout) bf16
    wn = wn_ref[...]
    wx1, wx2 = wx[:dout, :], wx[dout:, :]
    wn1, wn2 = wn[:dout, :], wn[dout:, :]
    gsc = gsc_ref[...]                           # (1, 2*dout) f32
    gsh = gsh_ref[...]
    gsc1, gsc2 = gsc[:, :dout], gsc[:, dout:]
    gsh1, gsh2 = gsh[:, :dout], gsh[:, dout:]
    bx = bx_ref[...]                             # (1, dout) f32
    bnb = bnb_ref[...]

    def graph_layer(x1, x2):
        # x = [x1 | x2] conceptually; x1, x2: (BB, N, dout) f32
        # cosine similarity (normalize, then batched x @ x^T)
        sq = (jnp.sum(x1 * x1, axis=-1, keepdims=True)
              + jnp.sum(x2 * x2, axis=-1, keepdims=True))      # (BB, N, 1)
        inv_nrm = 1.0 / jnp.maximum(jnp.sqrt(sq), L2_EPS)
        xn1 = x1 * inv_nrm
        xn2 = x2 * inv_nrm
        dn_sim = (((2,), (2,)), ((0,), (0,)))
        sim = (jax.lax.dot_general(xn1, xn1, dn_sim,
                                   preferred_element_type=jnp.float32)
               + jax.lax.dot_general(xn2, xn2, dn_sim,
                                     preferred_element_type=jnp.float32))
        sim = jnp.where(band[None, :, :], sim, NEG)            # temporal window

        # top-kn per row via kn vectorized argmax rounds; ranks 1..kn-1 = neighbors
        onehot_sum = jnp.zeros_like(sim)
        s = sim
        for r in range(kn):
            idx = jnp.argmax(s, axis=-1)                       # (BB, N)
            eq = col_ids[None, :, :] == idx[:, :, None]        # (BB, N, N)
            if r >= 1:
                onehot_sum = onehot_sum + eq.astype(jnp.float32)
            s = jnp.where(eq, NEG, s)                          # knock out current max
        dn_gather = (((2,), (1,)), ((0,), (0,)))
        inv_k = 1.0 / float(kn - 1)
        xnb1 = jax.lax.dot_general(onehot_sum, x1, dn_gather,
                                   preferred_element_type=jnp.float32) * inv_k
        xnb2 = jax.lax.dot_general(onehot_sum, x2, dn_gather,
                                   preferred_element_type=jnp.float32) * inv_k

        # self / neighbor projections: M = BB*N, bf16 feeds, f32 accumulation
        m = bb * n_nodes
        x1f = x1.reshape(m, dout).astype(jnp.bfloat16)
        x2f = x2.reshape(m, dout).astype(jnp.bfloat16)
        nb1f = xnb1.reshape(m, dout).astype(jnp.bfloat16)
        nb2f = xnb2.reshape(m, dout).astype(jnp.bfloat16)
        h_self = (jnp.dot(x1f, wx1, preferred_element_type=jnp.float32)
                  + jnp.dot(x2f, wx2, preferred_element_type=jnp.float32) + bx)
        h_neib = (jnp.dot(nb1f, wn1, preferred_element_type=jnp.float32)
                  + jnp.dot(nb2f, wn2, preferred_element_type=jnp.float32) + bnb)

        # L2 normalize over the (conceptually concatenated) feature dim,
        # then ReLU and BatchNorm1d(eval), all on the two halves separately.
        hsq = (jnp.sum(h_self * h_self, axis=-1, keepdims=True)
               + jnp.sum(h_neib * h_neib, axis=-1, keepdims=True))
        inv_h = 1.0 / jnp.maximum(jnp.sqrt(hsq), L2_EPS)
        o1 = jnp.maximum(h_self * inv_h, 0.0) * gsc1 + gsh1    # (BB*N, dout)
        o2 = jnp.maximum(h_neib * inv_h, 0.0) * gsc2 + gsh2
        o1 = o1.reshape(bb, n_nodes, dout)
        o2 = o2.reshape(bb, n_nodes, dout)
        return o1, o2, jnp.mean(o1, axis=1), jnp.mean(o2, axis=1)

    x1 = x0[:, :, :dout]
    x2 = x0[:, :, dout:]
    mA, mB = [], []
    for _ in range(3):                                         # chained layer reuse
        x1, x2, fa, fb = graph_layer(x1, x2)
        mA.append(fa)
        mB.append(fb)
    featsA = jnp.stack([mA[0], (mA[0] + mA[1]) * 0.5,
                        (mA[0] + mA[1] + mA[2]) * (1.0 / 3.0)], axis=1)
    featsB = jnp.stack([mB[0], (mB[0] + mB[1]) * 0.5,
                        (mB[0] + mB[1] + mB[2]) * (1.0 / 3.0)], axis=1)

    bts = bts_ref[...]                                         # (3, 2*dout) f32
    btb = btb_ref[...]
    bnf1 = featsA * bts[None, :, :dout] + btb[None, :, :dout]  # bottleneck BN (eval)
    bnf2 = featsB * bts[None, :, dout:] + btb[None, :, dout:]

    # lane-dense bn-feature store (padded to a multiple of 128)
    parts = [bnf1, bnf2]
    if dpad > 2 * dout:
        parts.append(jnp.zeros((bb, 3, dpad - 2 * dout), jnp.float32))
    bn_out_ref[...] = jnp.concatenate(parts, axis=-1)

    # classifiers: 3 heads, M = BB, lane-dense padded N, bf16 weight feed
    wc = wc_ref[...]                                           # (3, 2*dout, NCpad) bf16
    bnf1_b = bnf1.astype(jnp.bfloat16)
    bnf2_b = bnf2.astype(jnp.bfloat16)
    cls_rows = []
    for hh in range(3):
        c = (jnp.dot(bnf1_b[:, hh, :], wc[hh, :dout, :],
                     preferred_element_type=jnp.float32)
             + jnp.dot(bnf2_b[:, hh, :], wc[hh, dout:, :],
                       preferred_element_type=jnp.float32))    # (BB, NCpad)
        cls_rows.append(c)
    cls_ref[...] = jnp.stack(cls_rows, axis=1) + bc_ref[...][None, :, :]


def fused_graph_heads(nodes, params, *, p, t_range, kn, bb):
    b, n_nodes, din = nodes.shape
    dout = params["wx"].shape[1]
    dout2 = 2 * dout
    assert dout2 == din, "chained layer reuse needs outfeat*2 == infeat"
    assert b % bb == 0
    nc = params["wc"].shape[-1]
    dpad = _round_up(dout2, 128)
    ncpad = _round_up(nc, 128)

    wx = params["wx"].astype(jnp.bfloat16)
    wn = params["wn"].astype(jnp.bfloat16)
    wc = _pad_last(params["wc"], ncpad).astype(jnp.bfloat16)   # (3, din, NCpad)
    bc = _pad_last(params["bc"], ncpad)                        # (3, NCpad)

    kernel = functools.partial(fused_graph_heads_kernel, p=p, t_range=t_range,
                               kn=kn, dout=dout, dpad=dpad)
    bn_out, cls_out = pl.pallas_call(
        kernel,
        out_shape=(jax.ShapeDtypeStruct((b, 3, dpad), jnp.float32),
                   jax.ShapeDtypeStruct((b, 3, ncpad), jnp.float32)),
        grid=(b // bb,),
        in_specs=[
            pl.BlockSpec((bb, n_nodes, din), lambda j: (j, 0, 0)),
            pl.BlockSpec((din, dout), lambda j: (0, 0)),
            pl.BlockSpec((1, dout), lambda j: (0, 0)),
            pl.BlockSpec((din, dout), lambda j: (0, 0)),
            pl.BlockSpec((1, dout), lambda j: (0, 0)),
            pl.BlockSpec((1, dout2), lambda j: (0, 0)),
            pl.BlockSpec((1, dout2), lambda j: (0, 0)),
            pl.BlockSpec((3, dout2), lambda j: (0, 0)),
            pl.BlockSpec((3, dout2), lambda j: (0, 0)),
            pl.BlockSpec((3, din, ncpad), lambda j: (0, 0, 0)),
            pl.BlockSpec((3, ncpad), lambda j: (0, 0)),
        ],
        out_specs=(pl.BlockSpec((bb, 3, dpad), lambda j: (j, 0, 0)),
                   pl.BlockSpec((bb, 3, ncpad), lambda j: (j, 0, 0))),
        compiler_params=pltpu.CompilerParams(
            dimension_semantics=("parallel",),
            vmem_limit_bytes=VMEM_LIMIT),
    )(nodes, wx, params["bx"], wn, params["bneib"],
      params["g_scale"], params["g_shift"], params["bt_scale"],
      params["bt_shift"], wc, bc)
    return bn_out[:, :, :dout2], cls_out[:, :, :nc]


# ---------------------------------------------------------------------------
# Full forward (inference / eval mode).
# ---------------------------------------------------------------------------
def osnet_forward(x, params, cfg):
    b, t, c, w, h = x.shape
    p, t_range, kn = cfg["p"], cfg["t_range"], cfg["kn"]
    s = w * h
    assert s % p == 0
    stripe_len = s // p

    # (b,t,C,W,H) -> (b*t, C, W*H): pure reshape (no HBM relayout); bf16 feed.
    x_f = x.reshape(b * t, c, s).astype(jnp.bfloat16)

    bt = b * t
    bf = 1
    for cand in (8, 4, 2):          # keep grid length >= 2 for megacore
        if bt % cand == 0 and bt // cand >= 2:
            bf = cand
            break

    nodes = down_channel(x_f, params["w_dc"].astype(jnp.bfloat16),
                         params["dc_scale"], params["dc_shift"],
                         p=p, stripe_len=stripe_len, bf=bf)
    plances = nodes.shape[-1]
    nodes = nodes.reshape(b, t * p, plances)        # (b, N, plances)

    bb = 1
    for cand in (8, 4, 2):          # keep grid length >= 2 for megacore
        if b % cand == 0 and b // cand >= 2:
            bb = cand
            break

    bn_out, cls_out = fused_graph_heads(nodes, params, p=p, t_range=t_range,
                                        kn=kn, bb=bb)
    # eval-mode return of the reference: BN_feature_list[2] (+ all cls scores)
    return bn_out[:, 2, :], jnp.transpose(cls_out, (1, 0, 2))


# ---------------------------------------------------------------------------
if __name__ == "__main__":
    key = jax.random.PRNGKey(0)

    # small stand-ins: in_planes 2048 -> 64, plances 1024 -> 32, outfeat 512->16
    b, t, c_base, w_dim, h_dim = 2, 8, 64, 8, 4
    plances = 32
    p_stripes = 4           # p1 = 4
    d_out = plances // 2    # so 2*d_out == plances and chaining type-checks
    num_classes = 10
    cfg = {"p": p_stripes, "t_range": 1, "kn": 3}

    ks = jax.random.split(key, 8)
    x = jax.random.normal(ks[0], (b, t, c_base, w_dim, h_dim), jnp.float32)

    bn_scale_val = 1.0 / jnp.sqrt(1.0 + BN_EPS)   # fresh BN in eval mode
    params = {
        "w_dc": jax.random.normal(ks[1], (c_base, plances), jnp.float32) * 0.05,
        "dc_scale": jnp.full((1, plances), bn_scale_val, jnp.float32),
        "dc_shift": jnp.zeros((1, plances), jnp.float32),
        "wx": jax.random.normal(ks[2], (plances, d_out), jnp.float32) * 0.1,
        "bx": jax.random.normal(ks[3], (1, d_out), jnp.float32) * 0.01,
        "wn": jax.random.normal(ks[4], (plances, d_out), jnp.float32) * 0.1,
        "bneib": jax.random.normal(ks[5], (1, d_out), jnp.float32) * 0.01,
        "g_scale": jnp.full((1, 2 * d_out), bn_scale_val, jnp.float32),
        "g_shift": jnp.zeros((1, 2 * d_out), jnp.float32),
        "bt_scale": jnp.full((3, plances), bn_scale_val, jnp.float32),
        "bt_shift": jnp.zeros((3, plances), jnp.float32),
        "wc": jax.random.normal(ks[6], (3, plances, num_classes),
                                jnp.float32) * 0.001,
        "bc": jnp.zeros((3, num_classes), jnp.float32),
    }

    bn_feat, cls = osnet_forward(x, params, cfg)
    bn_feat = jax.block_until_ready(bn_feat)
    cls = jax.block_until_ready(cls)
    assert bn_feat.shape == (b, plances)
    assert cls.shape == (3, b, num_classes)
    assert bool(jnp.all(jnp.isfinite(bn_feat)))
    assert bool(jnp.all(jnp.isfinite(cls)))
    print("KERNEL_OK")
</pallas_src>

<mosaic_0001>
module attributes {stable_mosaic.version = 11 : i64} {
  func.func @down_channel_kernel(%arg0: i32, %arg1: memref<8x64x32xbf16, #tpu.memory_space<vmem>>, %arg2: memref<64x32xbf16, #tpu.memory_space<vmem>>, %arg3: memref<1x32xf32, #tpu.memory_space<vmem>>, %arg4: memref<1x32xf32, #tpu.memory_space<vmem>>, %arg5: memref<8x4x32xf32, #tpu.memory_space<vmem>>) attributes {dimension_semantics = [#tpu.dimension_semantics<parallel>], iteration_bounds = array<i64: 2>, scalar_prefetch = 0 : i64, scratch_operands = 0 : i64, tpu.core_type = #tpu.core_type<tc>, window_params = [{transform_indices = @transform_0, window_bounds = array<i64: 8, 64, 32>}, {pipeline_mode = #tpu.pipeline_mode<synchronous>, transform_indices = @transform_1, window_bounds = array<i64: 64, 32>}, {pipeline_mode = #tpu.pipeline_mode<synchronous>, transform_indices = @transform_2, window_bounds = array<i64: 1, 32>}, {pipeline_mode = #tpu.pipeline_mode<synchronous>, transform_indices = @transform_3, window_bounds = array<i64: 1, 32>}, {transform_indices = @transform_4, window_bounds = array<i64: 8, 4, 32>}]} {
    %c0 = arith.constant 0 : index
    %c0_0 = arith.constant 0 : index
    %0 = vector.load %arg2[%c0, %c0_0] : memref<64x32xbf16, #tpu.memory_space<vmem>>, vector<64x32xbf16>
    %c0_1 = arith.constant 0 : index
    %c0_2 = arith.constant 0 : index
    %1 = vector.load %arg3[%c0_1, %c0_2] : memref<1x32xf32, #tpu.memory_space<vmem>>, vector<1x32xf32>
    %c0_3 = arith.constant 0 : index
    %c0_4 = arith.constant 0 : index
    %2 = vector.load %arg4[%c0_3, %c0_4] : memref<1x32xf32, #tpu.memory_space<vmem>>, vector<1x32xf32>
    %c0_5 = arith.constant 0 : index
    %c0_6 = arith.constant 0 : index
    %c0_7 = arith.constant 0 : index
    %3 = vector.load %arg1[%c0_5, %c0_6, %c0_7] : memref<8x64x32xbf16, #tpu.memory_space<vmem>>, vector<1x64x32xbf16>
    %4 = vector.shape_cast %3 : vector<1x64x32xbf16> to vector<64x32xbf16>
    %cst = arith.constant dense<0.000000e+00> : vector<32x32xf32>
    %5 = tpu.matmul %4, %0, %cst {dimension_numbers = #tpu.dot_dimension_numbers<[0], [0], [1], [1], [0, 1, 1, 1], [], []>} : vector<64x32xbf16>, vector<64x32xbf16>, vector<32x32xf32> -> vector<32x32xf32>
    %6 = vector.broadcast %1 : vector<1x32xf32> to vector<32x32xf32>
    %7 = arith.mulf %5, %6 : vector<32x32xf32>
    %8 = vector.broadcast %2 : vector<1x32xf32> to vector<32x32xf32>
    %9 = arith.addf %7, %8 : vector<32x32xf32>
    %cst_8 = arith.constant 0.000000e+00 : f32
    %10 = vector.broadcast %cst_8 : f32 to vector<32x32xf32>
    %11 = arith.maximumf %9, %10 : vector<32x32xf32>
    %12 = vector.shape_cast %11 : vector<32x32xf32> to vector<4x8x32xf32>
    %cst_9 = arith.constant dense<0.000000e+00> : vector<4x32xf32>
    %13 = vector.multi_reduction <add>, %12, %cst_9 [1] : vector<4x8x32xf32> to vector<4x32xf32>
    %cst_10 = arith.constant 8.000000e+00 : f32
    %14 = vector.broadcast %cst_10 : f32 to vector<4x32xf32>
    %15 = arith.divf %13, %14 : vector<4x32xf32>
    %c1 = arith.constant 1 : index
    %c0_11 = arith.constant 0 : index
    %c0_12 = arith.constant 0 : index
    %16 = vector.load %arg1[%c1, %c0_11, %c0_12] : memref<8x64x32xbf16, #tpu.memory_space<vmem>>, vector<1x64x32xbf16>
    %17 = vector.shape_cast %16 : vector<1x64x32xbf16> to vector<64x32xbf16>
    %cst_13 = arith.constant dense<0.000000e+00> : vector<32x32xf32>
    %18 = tpu.matmul %17, %0, %cst_13 {dimension_numbers = #tpu.dot_dimension_numbers<[0], [0], [1], [1], [0, 1, 1, 1], [], []>} : vector<64x32xbf16>, vector<64x32xbf16>, vector<32x32xf32> -> vector<32x32xf32>
    %19 = vector.broadcast %1 : vector<1x32xf32> to vector<32x32xf32>
    %20 = arith.mulf %18, %19 : vector<32x32xf32>
    %21 = vector.broadcast %2 : vector<1x32xf32> to vector<32x32xf32>
    %22 = arith.addf %20, %21 : vector<32x32xf32>
    %cst_14 = arith.constant 0.000000e+00 : f32
    %23 = vector.broadcast %cst_14 : f32 to vector<32x32xf32>
    %24 = arith.maximumf %22, %23 : vector<32x32xf32>
    %25 = vector.shape_cast %24 : vector<32x32xf32> to vector<4x8x32xf32>
    %cst_15 = arith.constant dense<0.000000e+00> : vector<4x32xf32>
    %26 = vector.multi_reduction <add>, %25, %cst_15 [1] : vector<4x8x32xf32> to vector<4x32xf32>
    %cst_16 = arith.constant 8.000000e+00 : f32
    %27 = vector.broadcast %cst_16 : f32 to vector<4x32xf32>
    %28 = arith.divf %26, %27 : vector<4x32xf32>
    %c2 = arith.constant 2 : index
    %c0_17 = arith.constant 0 : index
    %c0_18 = arith.constant 0 : index
    %29 = vector.load %arg1[%c2, %c0_17, %c0_18] : memref<8x64x32xbf16, #tpu.memory_space<vmem>>, vector<1x64x32xbf16>
    %30 = vector.shape_cast %29 : vector<1x64x32xbf16> to vector<64x32xbf16>
    %cst_19 = arith.constant dense<0.000000e+00> : vector<32x32xf32>
    %31 = tpu.matmul %30, %0, %cst_19 {dimension_numbers = #tpu.dot_dimension_numbers<[0], [0], [1], [1], [0, 1, 1, 1], [], []>} : vector<64x32xbf16>, vector<64x32xbf16>, vector<32x32xf32> -> vector<32x32xf32>
    %32 = vector.broadcast %1 : vector<1x32xf32> to vector<32x32xf32>
    %33 = arith.mulf %31, %32 : vector<32x32xf32>
    %34 = vector.broadcast %2 : vector<1x32xf32> to vector<32x32xf32>
    %35 = arith.addf %33, %34 : vector<32x32xf32>
    %cst_20 = arith.constant 0.000000e+00 : f32
    %36 = vector.broadcast %cst_20 : f32 to vector<32x32xf32>
    %37 = arith.maximumf %35, %36 : vector<32x32xf32>
    %38 = vector.shape_cast %37 : vector<32x32xf32> to vector<4x8x32xf32>
    %cst_21 = arith.constant dense<0.000000e+00> : vector<4x32xf32>
    %39 = vector.multi_reduction <add>, %38, %cst_21 [1] : vector<4x8x32xf32> to vector<4x32xf32>
    %cst_22 = arith.constant 8.000000e+00 : f32
    %40 = vector.broadcast %cst_22 : f32 to vector<4x32xf32>
    %41 = arith.divf %39, %40 : vector<4x32xf32>
    %c3 = arith.constant 3 : index
    %c0_23 = arith.constant 0 : index
    %c0_24 = arith.constant 0 : index
    %42 = vector.load %arg1[%c3, %c0_23, %c0_24] : memref<8x64x32xbf16, #tpu.memory_space<vmem>>, vector<1x64x32xbf16>
    %43 = vector.shape_cast %42 : vector<1x64x32xbf16> to vector<64x32xbf16>
    %cst_25 = arith.constant dense<0.000000e+00> : vector<32x32xf32>
    %44 = tpu.matmul %43, %0, %cst_25 {dimension_numbers = #tpu.dot_dimension_numbers<[0], [0], [1], [1], [0, 1, 1, 1], [], []>} : vector<64x32xbf16>, vector<64x32xbf16>, vector<32x32xf32> -> vector<32x32xf32>
    %45 = vector.broadcast %1 : vector<1x32xf32> to vector<32x32xf32>
    %46 = arith.mulf %44, %45 : vector<32x32xf32>
    %47 = vector.broadcast %2 : vector<1x32xf32> to vector<32x32xf32>
    %48 = arith.addf %46, %47 : vector<32x32xf32>
    %cst_26 = arith.constant 0.000000e+00 : f32
    %49 = vector.broadcast %cst_26 : f32 to vector<32x32xf32>
    %50 = arith.maximumf %48, %49 : vector<32x32xf32>
    %51 = vector.shape_cast %50 : vector<32x32xf32> to vector<4x8x32xf32>
    %cst_27 = arith.constant dense<0.000000e+00> : vector<4x32xf32>
    %52 = vector.multi_reduction <add>, %51, %cst_27 [1] : vector<4x8x32xf32> to vector<4x32xf32>
    %cst_28 = arith.constant 8.000000e+00 : f32
    %53 = vector.broadcast %cst_28 : f32 to vector<4x32xf32>
    %54 = arith.divf %52, %53 : vector<4x32xf32>
    %c4 = arith.constant 4 : index
    %c0_29 = arith.constant 0 : index
    %c0_30 = arith.constant 0 : index
    %55 = vector.load %arg1[%c4, %c0_29, %c0_30] : memref<8x64x32xbf16, #tpu.memory_space<vmem>>, vector<1x64x32xbf16>
    %56 = vector.shape_cast %55 : vector<1x64x32xbf16> to vector<64x32xbf16>
    %cst_31 = arith.constant dense<0.000000e+00> : vector<32x32xf32>
    %57 = tpu.matmul %56, %0, %cst_31 {dimension_numbers = #tpu.dot_dimension_numbers<[0], [0], [1], [1], [0, 1, 1, 1], [], []>} : vector<64x32xbf16>, vector<64x32xbf16>, vector<32x32xf32> -> vector<32x32xf32>
    %58 = vector.broadcast %1 : vector<1x32xf32> to vector<32x32xf32>
    %59 = arith.mulf %57, %58 : vector<32x32xf32>
    %60 = vector.broadcast %2 : vector<1x32xf32> to vector<32x32xf32>
    %61 = arith.addf %59, %60 : vector<32x32xf32>
    %cst_32 = arith.constant 0.000000e+00 : f32
    %62 = vector.broadcast %cst_32 : f32 to vector<32x32xf32>
    %63 = arith.maximumf %61, %62 : vector<32x32xf32>
    %64 = vector.shape_cast %63 : vector<32x32xf32> to vector<4x8x32xf32>
    %cst_33 = arith.constant dense<0.000000e+00> : vector<4x32xf32>
    %65 = vector.multi_reduction <add>, %64, %cst_33 [1] : vector<4x8x32xf32> to vector<4x32xf32>
    %cst_34 = arith.constant 8.000000e+00 : f32
    %66 = vector.broadcast %cst_34 : f32 to vector<4x32xf32>
    %67 = arith.divf %65, %66 : vector<4x32xf32>
    %c5 = arith.constant 5 : index
    %c0_35 = arith.constant 0 : index
    %c0_36 = arith.constant 0 : index
    %68 = vector.load %arg1[%c5, %c0_35, %c0_36] : memref<8x64x32xbf16, #tpu.memory_space<vmem>>, vector<1x64x32xbf16>
    %69 = vector.shape_cast %68 : vector<1x64x32xbf16> to vector<64x32xbf16>
    %cst_37 = arith.constant dense<0.000000e+00> : vector<32x32xf32>
    %70 = tpu.matmul %69, %0, %cst_37 {dimension_numbers = #tpu.dot_dimension_numbers<[0], [0], [1], [1], [0, 1, 1, 1], [], []>} : vector<64x32xbf16>, vector<64x32xbf16>, vector<32x32xf32> -> vector<32x32xf32>
    %71 = vector.broadcast %1 : vector<1x32xf32> to vector<32x32xf32>
    %72 = arith.mulf %70, %71 : vector<32x32xf32>
    %73 = vector.broadcast %2 : vector<1x32xf32> to vector<32x32xf32>
    %74 = arith.addf %72, %73 : vector<32x32xf32>
    %cst_38 = arith.constant 0.000000e+00 : f32
    %75 = vector.broadcast %cst_38 : f32 to vector<32x32xf32>
    %76 = arith.maximumf %74, %75 : vector<32x32xf32>
    %77 = vector.shape_cast %76 : vector<32x32xf32> to vector<4x8x32xf32>
    %cst_39 = arith.constant dense<0.000000e+00> : vector<4x32xf32>
    %78 = vector.multi_reduction <add>, %77, %cst_39 [1] : vector<4x8x32xf32> to vector<4x32xf32>
    %cst_40 = arith.constant 8.000000e+00 : f32
    %79 = vector.broadcast %cst_40 : f32 to vector<4x32xf32>
    %80 = arith.divf %78, %79 : vector<4x32xf32>
    %c6 = arith.constant 6 : index
    %c0_41 = arith.constant 0 : index
    %c0_42 = arith.constant 0 : index
    %81 = vector.load %arg1[%c6, %c0_41, %c0_42] : memref<8x64x32xbf16, #tpu.memory_space<vmem>>, vector<1x64x32xbf16>
    %82 = vector.shape_cast %81 : vector<1x64x32xbf16> to vector<64x32xbf16>
    %cst_43 = arith.constant dense<0.000000e+00> : vector<32x32xf32>
    %83 = tpu.matmul %82, %0, %cst_43 {dimension_numbers = #tpu.dot_dimension_numbers<[0], [0], [1], [1], [0, 1, 1, 1], [], []>} : vector<64x32xbf16>, vector<64x32xbf16>, vector<32x32xf32> -> vector<32x32xf32>
    %84 = vector.broadcast %1 : vector<1x32xf32> to vector<32x32xf32>
    %85 = arith.mulf %83, %84 : vector<32x32xf32>
    %86 = vector.broadcast %2 : vector<1x32xf32> to vector<32x32xf32>
    %87 = arith.addf %85, %86 : vector<32x32xf32>
    %cst_44 = arith.constant 0.000000e+00 : f32
    %88 = vector.broadcast %cst_44 : f32 to vector<32x32xf32>
    %89 = arith.maximumf %87, %88 : vector<32x32xf32>
    %90 = vector.shape_cast %89 : vector<32x32xf32> to vector<4x8x32xf32>
    %cst_45 = arith.constant dense<0.000000e+00> : vector<4x32xf32>
    %91 = vector.multi_reduction <add>, %90, %cst_45 [1] : vector<4x8x32xf32> to vector<4x32xf32>
    %cst_46 = arith.constant 8.000000e+00 : f32
    %92 = vector.broadcast %cst_46 : f32 to vector<4x32xf32>
    %93 = arith.divf %91, %92 : vector<4x32xf32>
    %c7 = arith.constant 7 : index
    %c0_47 = arith.constant 0 : index
    %c0_48 = arith.constant 0 : index
    %94 = vector.load %arg1[%c7, %c0_47, %c0_48] : memref<8x64x32xbf16, #tpu.memory_space<vmem>>, vector<1x64x32xbf16>
    %95 = vector.shape_cast %94 : vector<1x64x32xbf16> to vector<64x32xbf16>
    %cst_49 = arith.constant dense<0.000000e+00> : vector<32x32xf32>
    %96 = tpu.matmul %95, %0, %cst_49 {dimension_numbers = #tpu.dot_dimension_numbers<[0], [0], [1], [1], [0, 1, 1, 1], [], []>} : vector<64x32xbf16>, vector<64x32xbf16>, vector<32x32xf32> -> vector<32x32xf32>
    %97 = vector.broadcast %1 : vector<1x32xf32> to vector<32x32xf32>
    %98 = arith.mulf %96, %97 : vector<32x32xf32>
    %99 = vector.broadcast %2 : vector<1x32xf32> to vector<32x32xf32>
    %100 = arith.addf %98, %99 : vector<32x32xf32>
    %cst_50 = arith.constant 0.000000e+00 : f32
    %101 = vector.broadcast %cst_50 : f32 to vector<32x32xf32>
    %102 = arith.maximumf %100, %101 : vector<32x32xf32>
    %103 = vector.shape_cast %102 : vector<32x32xf32> to vector<4x8x32xf32>
    %cst_51 = arith.constant dense<0.000000e+00> : vector<4x32xf32>
    %104 = vector.multi_reduction <add>, %103, %cst_51 [1] : vector<4x8x32xf32> to vector<4x32xf32>
    %cst_52 = arith.constant 8.000000e+00 : f32
    %105 = vector.broadcast %cst_52 : f32 to vector<4x32xf32>
    %106 = arith.divf %104, %105 : vector<4x32xf32>
    %107 = vector.shape_cast %15 : vector<4x32xf32> to vector<1x4x32xf32>
    %108 = vector.shape_cast %28 : vector<4x32xf32> to vector<1x4x32xf32>
    %109 = vector.shape_cast %41 : vector<4x32xf32> to vector<1x4x32xf32>
    %110 = vector.shape_cast %54 : vector<4x32xf32> to vector<1x4x32xf32>
    %111 = vector.shape_cast %67 : vector<4x32xf32> to vector<1x4x32xf32>
    %112 = vector.shape_cast %80 : vector<4x32xf32> to vector<1x4x32xf32>
    %113 = vector.shape_cast %93 : vector<4x32xf32> to vector<1x4x32xf32>
    %114 = vector.shape_cast %106 : vector<4x32xf32> to vector<1x4x32xf32>
    %115 = tpu.concatenate %107, %108, %109, %110, %111, %112, %113, %114 in 0 : vector<1x4x32xf32>, vector<1x4x32xf32>, vector<1x4x32xf32>, vector<1x4x32xf32>, vector<1x4x32xf32>, vector<1x4x32xf32>, vector<1x4x32xf32>, vector<1x4x32xf32> -> vector<8x4x32xf32>
    %c0_53 = arith.constant 0 : index
    %c0_54 = arith.constant 0 : index
    %c0_55 = arith.constant 0 : index
    %116 = vector.load %arg5[%c0_53, %c0_54, %c0_55] : memref<8x4x32xf32, #tpu.memory_space<vmem>>, vector<8x4x32xf32>
    tpu.vector_store %arg5[%c0_53, %c0_54, %c0_55], %115 {strides = array<i32>} : memref<8x4x32xf32, #tpu.memory_space<vmem>>, vector<8x4x32xf32>,
    return
  }
  func.func @transform_0(%arg0: i32) -> (i32, i32, i32) {
    %c0_i32 = arith.constant 0 : i32
    %c0_i32_0 = arith.constant 0 : i32
    %c0_i32_1 = arith.constant 0 : i32
    return %arg0, %c0_i32, %c0_i32_0 : i32, i32, i32
  }
  func.func @transform_1(%arg0: i32) -> (i32, i32) {
    %c0_i32 = arith.constant 0 : i32
    %c0_i32_0 = arith.constant 0 : i32
    %c0_i32_1 = arith.constant 0 : i32
    return %c0_i32, %c0_i32_0 : i32, i32
  }
  func.func @transform_2(%arg0: i32) -> (i32, i32) {
    %c0_i32 = arith.constant 0 : i32
    %c0_i32_0 = arith.constant 0 : i32
    %c0_i32_1 = arith.constant 0 : i32
    return %c0_i32, %c0_i32_0 : i32, i32
  }
  func.func @transform_3(%arg0: i32) -> (i32, i32) {
    %c0_i32 = arith.constant 0 : i32
    %c0_i32_0 = arith.constant 0 : i32
    %c0_i32_1 = arith.constant 0 : i32
    return %c0_i32, %c0_i32_0 : i32, i32
  }
  func.func @transform_4(%arg0: i32) -> (i32, i32, i32) {
    %c0_i32 = arith.constant 0 : i32
    %c0_i32_0 = arith.constant 0 : i32
    %c0_i32_1 = arith.constant 0 : i32
    return %arg0, %c0_i32, %c0_i32_0 : i32, i32, i32
  }
}

</mosaic_0001>

<llo_original>
// kernel: tpu_custom_call.1
$region0: #{tpu_custom_call.1}
  #allocation0 [shape = 'u32[]', space=smem, size = 0x4, offset = 0x4, fixed_abs, tag = 'smem constant byte address 0x4 - core index']
  #allocation1 [shape = 'u32[144,128]{1,0:T(1,128)}', space=vmem, size = 0x12000, scoped, tag = 'internal scratch']
  %s0 = inlined_call_operand.vmem [shape: bf16[16,64,32], index: 0, kind: input, shape index: {}]
  %s1 = inlined_call_operand.vmem [shape: bf16[64,32], index: 1, kind: input, shape index: {}]
  %s2 = inlined_call_operand.vmem [shape: f32[1,32], index: 2, kind: input, shape index: {}]
  %s3 = inlined_call_operand.vmem [shape: f32[1,32], index: 3, kind: input, shape index: {}]
  %s4 = inlined_call_operand.hbm [shape: f32[16,4,32], index: 4, kind: output, shape index: {}]
  %s5 = sld [smem:[#allocation0]]
  $region49: #{tpu_custom_call.1} parent=0
    _
  %s7 = ssub.s32 1, %s5
  %s8 = scalar_select 0, %s7, %s5
  $region1: #{tpu_custom_call.1} parent=0
    #allocation2 [shape = 'u8[32768]{0}', space=vmem, size = 0x8000, scoped, tag = 'output window, operand 0']
    #allocation3 [shape = 's32[2]{0}', space=sflag, size = 0x8, scoped, tag = 'scoped memory for tpu_custom_call.1']
    %9 = vsyncpa [#allocation3], 0
    %s10 = scalar_lea.sflag [#allocation3], 1
    %11 = vsyncpa %s10, 0
    loop: start=0, step=1, limit=4
    $region2: #{tpu_custom_call.1} parent=1 // loop_pre_header
      _
    $region3: #{tpu_custom_call.1} parent=1 // loop_header
      %s13 = sphi 0, %s17
      %p14 = scmp.ge.s32.totalorder %s13, 4
      %s23 = sphi 0, %s25
      %s26 = sphi 0, %s23
      %s27 = sphi 0, %s26
      %s43 = sphi 0, %s27
      %s47 = sphi 0, %s47
      %s49 = sphi 0, %s47
      %s50 = sphi 0, %s49
      %s64 = sphi 0, %s50
      %s68 = sphi 0, %s68
      %s70 = sphi 0, %s68
      %s71 = sphi 0, %s70
      %s85 = sphi 0, %s71
      %s89 = sphi 0, %s89
      %s91 = sphi 0, %s89
      %s92 = sphi 0, %s91
      %s106 = sphi 0, %s92
      %s112 = sphi 0, %s114
      %s115 = sphi 0, %s112
      %s116 = sphi 0, %s115
      %s132 = sphi 0, %s116
    $region4: #{tpu_custom_call.1} parent=1 // loop_header_branch
      %16 = sbr.rel (%p14) target = $region8
    $region5: #{tpu_custom_call.1} parent=1 // loop_body
      %s18 = ssub.s32 %s13, 1
      %s19 = ssub.s32 %s13, 2
      %s20 = sadd.s32 %s13, 1
      %s21 = ssub.s32 %s13, %s20
      %p22 = scmp.eq.s32.totalorder %s21, 0
      %s24 = sadd.s32 %s23, 1
      %s25 = scalar_select %p22, %s23, %s24
      %p28 = pneg %p22
      %p29 = scmp.eq.s32.totalorder %s13, 1
      %p30 = por %p28, %p29
      %p31 = scmp.ne.s32.totalorder %s23, %s26
      %p32 = scmp.eq.s32.totalorder %s13, 0
      %p33 = por %p31, %p32
      %p34 = scmp.ne.s32.totalorder %s23, %s26
      %p35 = scmp.eq.s32.totalorder %s18, 1
      %p36 = por %p34, %p35
      %p37 = scmp.ne.s32.totalorder %s26, %s27
      %p38 = scmp.eq.s32.totalorder %s18, 0
      %p39 = por %p37, %p38
      %p40 = scmp.ne.s32.totalorder %s26, %s27
      %p41 = scmp.eq.s32.totalorder %s19, 1
      %p42 = por %p40, %p41
      %p44 = scmp.ne.s32.totalorder %s27, %s43
      %p45 = scmp.eq.s32.totalorder %s19, 0
      %p46 = por %p44, %p45
      %s48 = sadd.s32 %s47, 1
      %p51 = scmp.eq.s32.totalorder %s13, 1
      %p52 = scmp.ne.s32.totalorder %s47, %s49
      %p53 = scmp.eq.s32.totalorder %s13, 0
      %p54 = por %p52, %p53
      %p55 = scmp.ne.s32.totalorder %s47, %s49
      %p56 = scmp.eq.s32.totalorder %s18, 1
      %p57 = por %p55, %p56
      %p58 = scmp.ne.s32.totalorder %s49, %s50
      %p59 = scmp.eq.s32.totalorder %s18, 0
      %p60 = por %p58, %p59
      %p61 = scmp.ne.s32.totalorder %s49, %s50
      %p62 = scmp.eq.s32.totalorder %s19, 1
      %p63 = por %p61, %p62
      %p65 = scmp.ne.s32.totalorder %s50, %s64
      %p66 = scmp.eq.s32.totalorder %s19, 0
      %p67 = por %p65, %p66
      %s69 = sadd.s32 %s68, 1
      %p72 = scmp.eq.s32.totalorder %s13, 1
      %p73 = scmp.ne.s32.totalorder %s68, %s70
      %p74 = scmp.eq.s32.totalorder %s13, 0
      %p75 = por %p73, %p74
      %p76 = scmp.ne.s32.totalorder %s68, %s70
      %p77 = scmp.eq.s32.totalorder %s18, 1
      %p78 = por %p76, %p77
      %p79 = scmp.ne.s32.totalorder %s70, %s71
      %p80 = scmp.eq.s32.totalorder %s18, 0
      %p81 = por %p79, %p80
      %p82 = scmp.ne.s32.totalorder %s70, %s71
      %p83 = scmp.eq.s32.totalorder %s19, 1
      %p84 = por %p82, %p83
      %p86 = scmp.ne.s32.totalorder %s71, %s85
      %p87 = scmp.eq.s32.totalorder %s19, 0
      %p88 = por %p86, %p87
      %s90 = sadd.s32 %s89, 1
      %p93 = scmp.eq.s32.totalorder %s13, 1
      %p94 = scmp.ne.s32.totalorder %s89, %s91
      %p95 = scmp.eq.s32.totalorder %s13, 0
      %p96 = por %p94, %p95
      %p97 = scmp.ne.s32.totalorder %s89, %s91
      %p98 = scmp.eq.s32.totalorder %s18, 1
      %p99 = por %p97, %p98
      %p100 = scmp.ne.s32.totalorder %s91, %s92
      %p101 = scmp.eq.s32.totalorder %s18, 0
      %p102 = por %p100, %p101
      %p103 = scmp.ne.s32.totalorder %s91, %s92
      %p104 = scmp.eq.s32.totalorder %s19, 1
      %p105 = por %p103, %p104
      %p107 = scmp.ne.s32.totalorder %s92, %s106
      %p108 = scmp.eq.s32.totalorder %s19, 0
      %p109 = por %p107, %p108
      %s110 = ssub.s32 %s13, %s20
      %p111 = scmp.eq.s32.totalorder %s110, 0
      %s113 = sadd.s32 %s112, 1
      %s114 = scalar_select %p111, %s112, %s113
      %p117 = pneg %p111
      %p118 = scmp.eq.s32.totalorder %s13, 1
      %p119 = por %p117, %p118
      %p120 = scmp.ne.s32.totalorder %s112, %s115
      %p121 = scmp.eq.s32.totalorder %s13, 0
      %p122 = por %p120, %p121
      %p123 = scmp.ne.s32.totalorder %s112, %s115
      %p124 = scmp.eq.s32.totalorder %s18, 1
      %p125 = por %p123, %p124
      %p126 = scmp.ne.s32.totalorder %s115, %s116
      %p127 = scmp.eq.s32.totalorder %s18, 0
      %p128 = por %p126, %p127
      %p129 = scmp.ne.s32.totalorder %s115, %s116
      %p130 = scmp.eq.s32.totalorder %s19, 1
      %p131 = por %p129, %p130
      %p133 = scmp.ne.s32.totalorder %s116, %s132
      %p134 = scmp.eq.s32.totalorder %s19, 0
      %p135 = por %p133, %p134
      %p136 = scmp.le.s32.totalorder 1, %s13
      %p137 = scmp.lt.s32.totalorder %s13, 3
      %p138 = pnand %p136, %p137
      %p139 = pneg %p138
      // Predicated region
      $region9: #{tpu_custom_call.1} parent=5 // pred_check
        _
      $region10: #{tpu_custom_call.1} parent=5 // pred_check_branch
        %141 = sbr.rel (%p138) target = $region12
      $region11: #{tpu_custom_call.1} parent=5 // pred_region
        %s142 = ssub.s32 %s13, 1
        // Predicated region
        $region13: #{tpu_custom_call.1} parent=11 // pred_check
          %p143 = pneg %p60
        $region14: #{tpu_custom_call.1} parent=11 // pred_check_branch
          %145 = sbr.rel (%p143) target = $region16
        $region15: #{tpu_custom_call.1} parent=11 // pred_region
          _
        $region16: #{tpu_custom_call.1} parent=11 // pred_fallthru
          _
        // Predicated region
        $region17: #{tpu_custom_call.1} parent=11 // pred_check
          %p146 = pneg %p81
        $region18: #{tpu_custom_call.1} parent=11 // pred_check_branch
          %148 = sbr.rel (%p146) target = $region20
        $region19: #{tpu_custom_call.1} parent=11 // pred_region
          _
        $region20: #{tpu_custom_call.1} parent=11 // pred_fallthru
          _
        // Predicated region
        $region21: #{tpu_custom_call.1} parent=11 // pred_check
          %p149 = pneg %p102
        $region22: #{tpu_custom_call.1} parent=11 // pred_check_branch
          %151 = sbr.rel (%p149) target = $region24
        $region23: #{tpu_custom_call.1} parent=11 // pred_region
          _
        $region24: #{tpu_custom_call.1} parent=11 // pred_fallthru
          _
      $region12: #{tpu_custom_call.1} parent=5 // pred_fallthru
        _
      %p152 = scmp.lt.s32.totalorder %s13, 2
      // Predicated region
      $region25: #{tpu_custom_call.1} parent=5 // pred_check
        %p153 = pneg %p152
      $region26: #{tpu_custom_call.1} parent=5 // pred_check_branch
        %155 = sbr.rel (%p153) target = $region28
      $region27: #{tpu_custom_call.1} parent=5 // pred_region
        // Predicated region
        $region29: #{tpu_custom_call.1} parent=27 // pred_check
          %p156 = pneg %p33
        $region30: #{tpu_custom_call.1} parent=27 // pred_check_branch
          %158 = sbr.rel (%p156) target = $region32
        $region31: #{tpu_custom_call.1} parent=27 // pred_region
          %s159 = smul.u32 8, %s13
          %p160 = scmp.lt.s32.totalorder %s159, 15
          %s161 = scalar_select %p160, %s159, 15
          %s162 = smul.addr %s161, 8
          %s163 = smul.addr %s162, 4
          %s164 = scalar_lea.vmem %s0, %s163
          %s165 = smul.u32 8, %s13
        $region32: #{tpu_custom_call.1} parent=27 // pred_fallthru
          _
      $region28: #{tpu_custom_call.1} parent=5 // pred_fallthru
        _
      %p166 = scmp.le.s32.totalorder 1, %s13
      %p167 = scmp.lt.s32.totalorder %s13, 3
      %p168 = pnand %p166, %p167
      %p169 = pneg %p168
      // Predicated region
      $region33: #{tpu_custom_call.1} parent=5 // pred_check
        _
      $region34: #{tpu_custom_call.1} parent=5 // pred_check_branch
        %171 = sbr.rel (%p168) target = $region36
      $region35: #{tpu_custom_call.1} parent=5 // pred_region
        %s172 = ssub.s32 %s13, 1
        %s173 = smul.u32 8, %s18
        %p174 = scmp.lt.s32.totalorder %s173, 15
        %s175 = scalar_select %p174, %s173, 15
        %s176 = smul.addr %s175, 8
        %s177 = smul.addr %s176, 4
        %s178 = scalar_lea.vmem %s0, %s177
        %p179 = pneg %p39
        %p180 = pneg %p36
        %p181 = pneg %p60
        %p182 = pneg %p57
        %p183 = pneg %p81
        %p184 = pneg %p78
        %p185 = pneg %p102
        %p186 = pneg %p99
        %p187 = pneg %p128
        %p188 = pneg %p125
        %s189 = sand.u32 %s115, 1
        %s190 = scalar_lea.sflag [#allocation3], %s189
        %s191 = sand.u32 %s115, 1
        %s192 = smul.addr %s191, 32
        %s193 = scalar_lea.vmem [#allocation2], %s192
        %s194 = smul.u32 8, %s18
        %p195 = scmp.lt.s32.totalorder %s194, 15
        %s196 = scalar_select %p195, %s194, 15
        %s197 = smul.addr %s196, 8
        %s198 = smul.addr %s197, 4
        %s199 = scalar_lea.vmem %s0, %s198
        %s200 = smul.u32 8, %s18
        %s201 = smul.u32 8, %s18
        %v203 = vld [vmem:[%s1] sm:$0xf]
        %v204 = vld [vmem:[%s1 + $0x4] sm:$0xf]
        %v205 = vld [vmem:[%s1 + $0x8] sm:$0xf]
        %v206 = vld [vmem:[%s1 + $0xc] sm:$0xf]
        %v207 = vld [vmem:[%s1 + $0x10] sm:$0xf]
        %v208 = vld [vmem:[%s1 + $0x14] sm:$0xf]
        %v209 = vld [vmem:[%s1 + $0x18] sm:$0xf]
        %v210 = vld [vmem:[%s1 + $0x1c] sm:$0xf]
        %v211 = vld [vmem:[%s2] sm:$0x1]
        %v212 = vld [vmem:[%s3] sm:$0x1]
        %v213 = vld [vmem:[%s199] sm:$0xf]
        %v214 = vld [vmem:[%s199 + $0x4] sm:$0xf]
        %v215 = vld [vmem:[%s199 + $0x8] sm:$0xf]
        %v216 = vld [vmem:[%s199 + $0xc] sm:$0xf]
        %v217 = vld [vmem:[%s199 + $0x10] sm:$0xf]
        %v218 = vld [vmem:[%s199 + $0x14] sm:$0xf]
        %v219 = vld [vmem:[%s199 + $0x18] sm:$0xf]
        %v220 = vld [vmem:[%s199 + $0x1c] sm:$0xf]
        %v229 = vunpack.c.l.b16 %v213
        %v230 = vunpack.c.l.b16 %v214
        %v231 = vunpack.c.l.b16 %v215
        %v232 = vunpack.c.l.b16 %v216
        %v233 = vunpack.c.l.b16 %v217
        %v234 = vunpack.c.l.b16 %v218
        %v235 = vunpack.c.l.b16 %v219
        %v236 = vunpack.c.l.b16 %v220
        %v237 = vpack.c.b16 %v230, %v229
        %v238 = vpack.c.b16 %v232, %v231
        %v239 = vpack.c.b16 %v234, %v233
        %v240 = vpack.c.b16 %v236, %v235
        %245 = vxpose.xlu0.c.b16.start [1/8] %v237, 128
        %246 = vxpose.xlu0.c.b16.cont [2/8] %v238, 128
        %247 = vxpose.xlu0.c.b16.cont [3/8] %v239, 128
        %248 = vxpose.xlu0.c.b16.cont [4/8] %v240, 128
        %249 = vxpose.xlu0.c.b16.cont [5/8] 0, 128
        %250 = vxpose.xlu0.c.b16.cont [6/8] 0, 128
        %251 = vxpose.xlu0.c.b16.cont [7/8] 0, 128
        %252 = vxpose.xlu0.c.b16.end [8/8] 0, 128
        %v253 = vpop.trf.xlu0
        %v254 = vpop.trf.xlu0
        %v255 = vpop.trf.xlu0
        %v256 = vpop.trf.xlu0
        %v257 = vpop.trf.xlu0
        %v258 = vpop.trf.xlu0
        %v259 = vpop.trf.xlu0
        %v260 = vpop.trf.xlu0
        %v269 = vunpack.c.l.b16 %v203
        %v270 = vunpack.c.l.b16 %v204
        %v271 = vunpack.c.l.b16 %v205
        %v272 = vunpack.c.l.b16 %v206
        %v273 = vunpack.c.l.b16 %v207
        %v274 = vunpack.c.l.b16 %v208
        %v275 = vunpack.c.l.b16 %v209
        %v276 = vunpack.c.l.b16 %v210
        %v277 = vpack.c.b16 %v270, %v269
        %v278 = vpack.c.b16 %v272, %v271
        %v279 = vpack.c.b16 %v274, %v273
        %v280 = vpack.c.b16 %v276, %v275
        %vm285 = vcmask 523264
        %v287 = vsel %vm285, %v253, 0
        %v290 = vsel %vm285, %v254, 0
        %292 = vmatprep.subr.bf16.mxu0 0
        %293 = vmatpush1.bf16.msra.mxu0 0
        %294 = vmatprep.subr.bf16.mxu0 0
        %295 = vmatpush1.bf16.msra.mxu0 0
        %296 = vmatprep.subr.bf16.mxu0 0
        %297 = vmatpush1.bf16.msra.mxu0 0
        %298 = vmatprep.subr.bf16.mxu0 0
        %299 = vmatpush1.bf16.msra.mxu0 0
        %300 = vmatprep.subr.bf16.mxu0 0
        %301 = vmatpush1.bf16.msra.mxu0 %v280
        %302 = vmatprep.subr.bf16.mxu0 0
        %303 = vmatpush1.bf16.msra.mxu0 %v279
        %304 = vmatprep.subr.bf16.mxu0 0
        %305 = vmatpush1.bf16.msra.mxu0 %v278
        %306 = vmatprep.subr.bf16.mxu0 0
        %307 = vmatpush1.bf16.msra.mxu0 %v277
        %308 = vmatprep.subr.bf16.mxu0 0
        %309 = vmatpush2.bf16.msra.mxu0 0
        %310 = vmatprep.subr.bf16.mxu0 0
        %311 = vmatpush2.bf16.msra.mxu0 0
        %312 = vmatprep.subr.bf16.mxu0 0
        %313 = vmatpush2.bf16.msra.mxu0 0
        %314 = vmatprep.subr.bf16.mxu0 0
        %315 = vmatpush2.bf16.msra.mxu0 0
        %316 = vmatprep.subr.bf16.mxu0 0
        %317 = vmatpush2.bf16.msra.mxu0 0
        %318 = vmatprep.subr.bf16.mxu0 0
        %319 = vmatpush2.bf16.msra.mxu0 0
        %320 = vmatprep.subr.bf16.mxu0 0
        %321 = vmatpush2.bf16.msra.mxu0 0
        %322 = vmatprep.subr.bf16.mxu0 0
        %323 = vmatpush2.bf16.msra.mxu0 0
        %324 = vmatprep.mubr.bf16.mxu0 0
        %325 = vmatmul.mubr.bf16.gmra.mxu0 %v287
        %v326 = vpop.f32.mrf.mxu0
        %v327 = vadd.f32 0.0, %v326
        %v328 = vpop.f32.mrf.mxu0
        %v329 = vpop.f32.mrf.mxu0
        %v330 = vadd.f32 0.0, %v329
        %v331 = vpop.f32.mrf.mxu0
        %332 = vmatprep.mubr.bf16.mxu0 0
        %333 = vmatmul.mubr.bf16.gmra.mxu0 %v290
        %v334 = vpop.f32.mrf.mxu0
        %v335 = vadd.f32 0.0, %v334
        %v336 = vpop.f32.mrf.mxu0
        %v337 = vpop.f32.mrf.mxu0
        %v338 = vadd.f32 0.0, %v337
        %v339 = vpop.f32.mrf.mxu0
        %340 = vdwg.mxu0
        %v342 = vlaneseq
        %v343 = vshrl.u32 %v342, 7
        %v344 = vsub.s32 0, %v343
        %v345 = vrot.slane %v211, %v344
        %v347 = vmul.f32 %v327, %v345
        %v348 = vmul.f32 %v330, %v345
        %v349 = vmul.f32 %v335, %v345
        %v350 = vmul.f32 %v338, %v345
        %v352 = vlaneseq
        %v353 = vshrl.u32 %v352, 7
        %v354 = vsub.s32 0, %v353
        %v355 = vrot.slane %v212, %v354
        %v357 = vadd.f32 %v347, %v355
        %v358 = vadd.f32 %v348, %v355
        %v359 = vadd.f32 %v349, %v355
        %v360 = vadd.f32 %v350, %v355
        %v361 = vmax.f32 %v357, 0.0
        %v362 = vmax.f32 %v358, 0.0
        %v363 = vmax.f32 %v359, 0.0
        %v364 = vmax.f32 %v360, 0.0
        %vm365 = vcmask 261120
        %v366 = vsel %vm365, %v361, 0.0
        %v367 = vrot.slane %v366, 4
        %v368 = vadd.f32 %v366, %v367
        %v369 = vrot.slane %v368, 2
        %v370 = vadd.f32 %v368, %v369
        %v371 = vrot.slane %v370, 1
        %v372 = vadd.f32 %v370, %v371
        %v373 = vsel %vm365, %v362, 0.0
        %v374 = vrot.slane %v373, 4
        %v375 = vadd.f32 %v373, %v374
        %v376 = vrot.slane %v375, 2
        %v377 = vadd.f32 %v375, %v376
        %v378 = vrot.slane %v377, 1
        %v379 = vadd.f32 %v377, %v378
        %v380 = vsel %vm365, %v363, 0.0
        %v381 = vrot.slane %v380, 4
        %v382 = vadd.f32 %v380, %v381
        %v383 = vrot.slane %v382, 2
        %v384 = vadd.f32 %v382, %v383
        %v385 = vrot.slane %v384, 1
        %v386 = vadd.f32 %v384, %v385
        %v387 = vsel %vm365, %v364, 0.0
        %v388 = vrot.slane %v387, 4
        %v389 = vadd.f32 %v387, %v388
        %v390 = vrot.slane %v389, 2
        %v391 = vadd.f32 %v389, %v390
        %v392 = vrot.slane %v391, 1
        %v393 = vadd.f32 %v391, %v392
        %v394 = vrcp.pop 8.0
        %v395 = vmul.f32 %v372, %v394
        %v396 = vmul.f32 %v379, %v394
        %v397 = vmul.f32 %v386, %v394
        %v398 = vmul.f32 %v393, %v394
        %s399 = scalar_lea.vmem %s199, 32
        %v400 = vld [vmem:[%s399] sm:$0xf]
        %v401 = vld [vmem:[%s399 + $0x4] sm:$0xf]
        %v402 = vld [vmem:[%s399 + $0x8] sm:$0xf]
        %v403 = vld [vmem:[%s399 + $0xc] sm:$0xf]
        %v404 = vld [vmem:[%s399 + $0x10] sm:$0xf]
        %v405 = vld [vmem:[%s399 + $0x14] sm:$0xf]
        %v406 = vld [vmem:[%s399 + $0x18] sm:$0xf]
        %v407 = vld [vmem:[%s399 + $0x1c] sm:$0xf]
        %v416 = vunpack.c.l.b16 %v400
        %v417 = vunpack.c.l.b16 %v401
        %v418 = vunpack.c.l.b16 %v402
        %v419 = vunpack.c.l.b16 %v403
        %v420 = vunpack.c.l.b16 %v404
        %v421 = vunpack.c.l.b16 %v405
        %v422 = vunpack.c.l.b16 %v406
        %v423 = vunpack.c.l.b16 %v407
        %v424 = vpack.c.b16 %v417, %v416
        %v425 = vpack.c.b16 %v419, %v418
        %v426 = vpack.c.b16 %v421, %v420
        %v427 = vpack.c.b16 %v423, %v422
        %432 = vxpose.xlu0.c.b16.start [1/8] %v424, 128
        %433 = vxpose.xlu0.c.b16.cont [2/8] %v425, 128
        %434 = vxpose.xlu0.c.b16.cont [3/8] %v426, 128
        %435 = vxpose.xlu0.c.b16.cont [4/8] %v427, 128
        %436 = vxpose.xlu0.c.b16.cont [5/8] 0, 128
        %437 = vxpose.xlu0.c.b16.cont [6/8] 0, 128
        %438 = vxpose.xlu0.c.b16.cont [7/8] 0, 128
        %439 = vxpose.xlu0.c.b16.end [8/8] 0, 128
        %v440 = vpop.trf.xlu0
        %v441 = vpop.trf.xlu0
        %v442 = vpop.trf.xlu0
        %v443 = vpop.trf.xlu0
        %v444 = vpop.trf.xlu0
        %v445 = vpop.trf.xlu0
        %v446 = vpop.trf.xlu0
        %v447 = vpop.trf.xlu0
        %v449 = vsel %vm285, %v440, 0
        %v452 = vsel %vm285, %v441, 0
        %454 = vmatprep.subr.bf16.mxu0 0
        %455 = vmatpush1.bf16.msra.mxu0 0
        %456 = vmatprep.subr.bf16.mxu0 0
        %457 = vmatpush1.bf16.msra.mxu0 0
        %458 = vmatprep.subr.bf16.mxu0 0
        %459 = vmatpush1.bf16.msra.mxu0 0
        %460 = vmatprep.subr.bf16.mxu0 0
        %461 = vmatpush1.bf16.msra.mxu0 0
        %462 = vmatprep.subr.bf16.mxu0 0
        %463 = vmatpush1.bf16.msra.mxu0 %v280
        %464 = vmatprep.subr.bf16.mxu0 0
        %465 = vmatpush1.bf16.msra.mxu0 %v279
        %466 = vmatprep.subr.bf16.mxu0 0
        %467 = vmatpush1.bf16.msra.mxu0 %v278
        %468 = vmatprep.subr.bf16.mxu0 0
        %469 = vmatpush1.bf16.msra.mxu0 %v277
        %470 = vmatprep.subr.bf16.mxu0 0
        %471 = vmatpush2.bf16.msra.mxu0 0
        %472 = vmatprep.subr.bf16.mxu0 0
        %473 = vmatpush2.bf16.msra.mxu0 0
        %474 = vmatprep.subr.bf16.mxu0 0
        %475 = vmatpush2.bf16.msra.mxu0 0
        %476 = vmatprep.subr.bf16.mxu0 0
        %477 = vmatpush2.bf16.msra.mxu0 0
        %478 = vmatprep.subr.bf16.mxu0 0
        %479 = vmatpush2.bf16.msra.mxu0 0
        %480 = vmatprep.subr.bf16.mxu0 0
        %481 = vmatpush2.bf16.msra.mxu0 0
        %482 = vmatprep.subr.bf16.mxu0 0
        %483 = vmatpush2.bf16.msra.mxu0 0
        %484 = vmatprep.subr.bf16.mxu0 0
        %485 = vmatpush2.bf16.msra.mxu0 0
        %486 = vmatprep.mubr.bf16.mxu0 0
        %487 = vmatmul.mubr.bf16.gmra.mxu0 %v449
        %v488 = vpop.f32.mrf.mxu0
        %v489 = vadd.f32 0.0, %v488
        %v490 = vpop.f32.mrf.mxu0
        %v491 = vpop.f32.mrf.mxu0
        %v492 = vadd.f32 0.0, %v491
        %v493 = vpop.f32.mrf.mxu0
        %494 = vmatprep.mubr.bf16.mxu0 0
        %495 = vmatmul.mubr.bf16.gmra.mxu0 %v452
        %v496 = vpop.f32.mrf.mxu0
        %v497 = vadd.f32 0.0, %v496
        %v498 = vpop.f32.mrf.mxu0
        %v499 = vpop.f32.mrf.mxu0
        %v500 = vadd.f32 0.0, %v499
        %v501 = vpop.f32.mrf.mxu0
        %502 = vdwg.mxu0
        %v503 = vmul.f32 %v489, %v345
        %v504 = vmul.f32 %v492, %v345
        %v505 = vmul.f32 %v497, %v345
        %v506 = vmul.f32 %v500, %v345
        %v507 = vadd.f32 %v503, %v355
        %v508 = vadd.f32 %v504, %v355
        %v509 = vadd.f32 %v505, %v355
        %v510 = vadd.f32 %v506, %v355
        %v511 = vmax.f32 %v507, 0.0
        %v512 = vmax.f32 %v508, 0.0
        %v513 = vmax.f32 %v509, 0.0
        %v514 = vmax.f32 %v510, 0.0
        %v515 = vsel %vm365, %v511, 0.0
        %v516 = vrot.slane %v515, 4
        %v517 = vadd.f32 %v515, %v516
        %v518 = vrot.slane %v517, 2
        %v519 = vadd.f32 %v517, %v518
        %v520 = vrot.slane %v519, 1
        %v521 = vadd.f32 %v519, %v520
        %v522 = vsel %vm365, %v512, 0.0
        %v523 = vrot.slane %v522, 4
        %v524 = vadd.f32 %v522, %v523
        %v525 = vrot.slane %v524, 2
        %v526 = vadd.f32 %v524, %v525
        %v527 = vrot.slane %v526, 1
        %v528 = vadd.f32 %v526, %v527
        %v529 = vsel %vm365, %v513, 0.0
        %v530 = vrot.slane %v529, 4
        %v531 = vadd.f32 %v529, %v530
        %v532 = vrot.slane %v531, 2
        %v533 = vadd.f32 %v531, %v532
        %v534 = vrot.slane %v533, 1
        %v535 = vadd.f32 %v533, %v534
        %v536 = vsel %vm365, %v514, 0.0
        %v537 = vrot.slane %v536, 4
        %v538 = vadd.f32 %v536, %v537
        %v539 = vrot.slane %v538, 2
        %v540 = vadd.f32 %v538, %v539
        %v541 = vrot.slane %v540, 1
        %v542 = vadd.f32 %v540, %v541
        %v543 = vmul.f32 %v521, %v394
        %v544 = vmul.f32 %v528, %v394
        %v545 = vmul.f32 %v535, %v394
        %v546 = vmul.f32 %v542, %v394
        %s547 = scalar_lea.vmem %s199, 64
        %v548 = vld [vmem:[%s547] sm:$0xf]
        %v549 = vld [vmem:[%s547 + $0x4] sm:$0xf]
        %v550 = vld [vmem:[%s547 + $0x8] sm:$0xf]
        %v551 = vld [vmem:[%s547 + $0xc] sm:$0xf]
        %v552 = vld [vmem:[%s547 + $0x10] sm:$0xf]
        %v553 = vld [vmem:[%s547 + $0x14] sm:$0xf]
        %v554 = vld [vmem:[%s547 + $0x18] sm:$0xf]
        %v555 = vld [vmem:[%s547 + $0x1c] sm:$0xf]
        %v564 = vunpack.c.l.b16 %v548
        %v565 = vunpack.c.l.b16 %v549
        %v566 = vunpack.c.l.b16 %v550
        %v567 = vunpack.c.l.b16 %v551
        %v568 = vunpack.c.l.b16 %v552
        %v569 = vunpack.c.l.b16 %v553
        %v570 = vunpack.c.l.b16 %v554
        %v571 = vunpack.c.l.b16 %v555
        %v572 = vpack.c.b16 %v565, %v564
        %v573 = vpack.c.b16 %v567, %v566
        %v574 = vpack.c.b16 %v569, %v568
        %v575 = vpack.c.b16 %v571, %v570
        %580 = vxpose.xlu0.c.b16.start [1/8] %v572, 128
        %581 = vxpose.xlu0.c.b16.cont [2/8] %v573, 128
        %582 = vxpose.xlu0.c.b16.cont [3/8] %v574, 128
        %583 = vxpose.xlu0.c.b16.cont [4/8] %v575, 128
        %584 = vxpose.xlu0.c.b16.cont [5/8] 0, 128
        %585 = vxpose.xlu0.c.b16.cont [6/8] 0, 128
        %586 = vxpose.xlu0.c.b16.cont [7/8] 0, 128
        %587 = vxpose.xlu0.c.b16.end [8/8] 0, 128
        %v588 = vpop.trf.xlu0
        %v589 = vpop.trf.xlu0
        %v590 = vpop.trf.xlu0
        %v591 = vpop.trf.xlu0
        %v592 = vpop.trf.xlu0
        %v593 = vpop.trf.xlu0
        %v594 = vpop.trf.xlu0
        %v595 = vpop.trf.xlu0
        %v597 = vsel %vm285, %v588, 0
        %v600 = vsel %vm285, %v589, 0
        %602 = vmatprep.subr.bf16.mxu0 0
        %603 = vmatpush1.bf16.msra.mxu0 0
        %604 = vmatprep.subr.bf16.mxu0 0
        %605 = vmatpush1.bf16.msra.mxu0 0
        %606 = vmatprep.subr.bf16.mxu0 0
        %607 = vmatpush1.bf16.msra.mxu0 0
        %608 = vmatprep.subr.bf16.mxu0 0
        %609 = vmatpush1.bf16.msra.mxu0 0
        %610 = vmatprep.subr.bf16.mxu0 0
        %611 = vmatpush1.bf16.msra.mxu0 %v280
        %612 = vmatprep.subr.bf16.mxu0 0
        %613 = vmatpush1.bf16.msra.mxu0 %v279
        %614 = vmatprep.subr.bf16.mxu0 0
        %615 = vmatpush1.bf16.msra.mxu0 %v278
        %616 = vmatprep.subr.bf16.mxu0 0
        %617 = vmatpush1.bf16.msra.mxu0 %v277
        %618 = vmatprep.subr.bf16.mxu0 0
        %619 = vmatpush2.bf16.msra.mxu0 0
        %620 = vmatprep.subr.bf16.mxu0 0
        %621 = vmatpush2.bf16.msra.mxu0 0
        %622 = vmatprep.subr.bf16.mxu0 0
        %623 = vmatpush2.bf16.msra.mxu0 0
        %624 = vmatprep.subr.bf16.mxu0 0
        %625 = vmatpush2.bf16.msra.mxu0 0
        %626 = vmatprep.subr.bf16.mxu0 0
        %627 = vmatpush2.bf16.msra.mxu0 0
        %628 = vmatprep.subr.bf16.mxu0 0
        %629 = vmatpush2.bf16.msra.mxu0 0
        %630 = vmatprep.subr.bf16.mxu0 0
        %631 = vmatpush2.bf16.msra.mxu0 0
        %632 = vmatprep.subr.bf16.mxu0 0
        %633 = vmatpush2.bf16.msra.mxu0 0
        %634 = vmatprep.mubr.bf16.mxu0 0
        %635 = vmatmul.mubr.bf16.gmra.mxu0 %v597
        %v636 = vpop.f32.mrf.mxu0
        %v637 = vadd.f32 0.0, %v636
        %v638 = vpop.f32.mrf.mxu0
        %v639 = vpop.f32.mrf.mxu0
        %v640 = vadd.f32 0.0, %v639
        %v641 = vpop.f32.mrf.mxu0
        %642 = vmatprep.mubr.bf16.mxu0 0
        %643 = vmatmul.mubr.bf16.gmra.mxu0 %v600
        %v644 = vpop.f32.mrf.mxu0
        %v645 = vadd.f32 0.0, %v644
        %v646 = vpop.f32.mrf.mxu0
        %v647 = vpop.f32.mrf.mxu0
        %v648 = vadd.f32 0.0, %v647
        %v649 = vpop.f32.mrf.mxu0
        %650 = vdwg.mxu0
        %v651 = vmul.f32 %v637, %v345
        %v652 = vmul.f32 %v640, %v345
        %v653 = vmul.f32 %v645, %v345
        %v654 = vmul.f32 %v648, %v345
        %v655 = vadd.f32 %v651, %v355
        %v656 = vadd.f32 %v652, %v355
        %v657 = vadd.f32 %v653, %v355
        %v658 = vadd.f32 %v654, %v355
        %v659 = vmax.f32 %v655, 0.0
        %v660 = vmax.f32 %v656, 0.0
        %v661 = vmax.f32 %v657, 0.0
        %v662 = vmax.f32 %v658, 0.0
        %v663 = vsel %vm365, %v659, 0.0
        %v664 = vrot.slane %v663, 4
        %v665 = vadd.f32 %v663, %v664
        %v666 = vrot.slane %v665, 2
        %v667 = vadd.f32 %v665, %v666
        %v668 = vrot.slane %v667, 1
        %v669 = vadd.f32 %v667, %v668
        %v670 = vsel %vm365, %v660, 0.0
        %v671 = vrot.slane %v670, 4
        %v672 = vadd.f32 %v670, %v671
        %v673 = vrot.slane %v672, 2
        %v674 = vadd.f32 %v672, %v673
        %v675 = vrot.slane %v674, 1
        %v676 = vadd.f32 %v674, %v675
        %v677 = vsel %vm365, %v661, 0.0
        %v678 = vrot.slane %v677, 4
        %v679 = vadd.f32 %v677, %v678
        %v680 = vrot.slane %v679, 2
        %v681 = vadd.f32 %v679, %v680
        %v682 = vrot.slane %v681, 1
        %v683 = vadd.f32 %v681, %v682
        %v684 = vsel %vm365, %v662, 0.0
        %v685 = vrot.slane %v684, 4
        %v686 = vadd.f32 %v684, %v685
        %v687 = vrot.slane %v686, 2
        %v688 = vadd.f32 %v686, %v687
        %v689 = vrot.slane %v688, 1
        %v690 = vadd.f32 %v688, %v689
        %v691 = vmul.f32 %v669, %v394
        %v692 = vmul.f32 %v676, %v394
        %v693 = vmul.f32 %v683, %v394
        %v694 = vmul.f32 %v690, %v394
        %s695 = scalar_lea.vmem %s199, 96
        %v696 = vld [vmem:[%s695] sm:$0xf]
        %v697 = vld [vmem:[%s695 + $0x4] sm:$0xf]
        %v698 = vld [vmem:[%s695 + $0x8] sm:$0xf]
        %v699 = vld [vmem:[%s695 + $0xc] sm:$0xf]
        %v700 = vld [vmem:[%s695 + $0x10] sm:$0xf]
        %v701 = vld [vmem:[%s695 + $0x14] sm:$0xf]
        %v702 = vld [vmem:[%s695 + $0x18] sm:$0xf]
        %v703 = vld [vmem:[%s695 + $0x1c] sm:$0xf]
        %v712 = vunpack.c.l.b16 %v696
        %v713 = vunpack.c.l.b16 %v697
        %v714 = vunpack.c.l.b16 %v698
        %v715 = vunpack.c.l.b16 %v699
        %v716 = vunpack.c.l.b16 %v700
        %v717 = vunpack.c.l.b16 %v701
        %v718 = vunpack.c.l.b16 %v702
        %v719 = vunpack.c.l.b16 %v703
        %v720 = vpack.c.b16 %v713, %v712
        %v721 = vpack.c.b16 %v715, %v714
        %v722 = vpack.c.b16 %v717, %v716
        %v723 = vpack.c.b16 %v719, %v718
        %728 = vxpose.xlu0.c.b16.start [1/8] %v720, 128
        %729 = vxpose.xlu0.c.b16.cont [2/8] %v721, 128
        %730 = vxpose.xlu0.c.b16.cont [3/8] %v722, 128
        %731 = vxpose.xlu0.c.b16.cont [4/8] %v723, 128
        %732 = vxpose.xlu0.c.b16.cont [5/8] 0, 128
        %733 = vxpose.xlu0.c.b16.cont [6/8] 0, 128
        %734 = vxpose.xlu0.c.b16.cont [7/8] 0, 128
        %735 = vxpose.xlu0.c.b16.end [8/8] 0, 128
        %v736 = vpop.trf.xlu0
        %v737 = vpop.trf.xlu0
        %v738 = vpop.trf.xlu0
        %v739 = vpop.trf.xlu0
        %v740 = vpop.trf.xlu0
        %v741 = vpop.trf.xlu0
        %v742 = vpop.trf.xlu0
        %v743 = vpop.trf.xlu0
        %v745 = vsel %vm285, %v736, 0
        %v748 = vsel %vm285, %v737, 0
        %750 = vmatprep.subr.bf16.mxu0 0
        %751 = vmatpush1.bf16.msra.mxu0 0
        %752 = vmatprep.subr.bf16.mxu0 0
        %753 = vmatpush1.bf16.msra.mxu0 0
        %754 = vmatprep.subr.bf16.mxu0 0
        %755 = vmatpush1.bf16.msra.mxu0 0
        %756 = vmatprep.subr.bf16.mxu0 0
        %757 = vmatpush1.bf16.msra.mxu0 0
        %758 = vmatprep.subr.bf16.mxu0 0
        %759 = vmatpush1.bf16.msra.mxu0 %v280
        %760 = vmatprep.subr.bf16.mxu0 0
        %761 = vmatpush1.bf16.msra.mxu0 %v279
        %762 = vmatprep.subr.bf16.mxu0 0
        %763 = vmatpush1.bf16.msra.mxu0 %v278
        %764 = vmatprep.subr.bf16.mxu0 0
        %765 = vmatpush1.bf16.msra.mxu0 %v277
        %766 = vmatprep.subr.bf16.mxu0 0
        %767 = vmatpush2.bf16.msra.mxu0 0
        %768 = vmatprep.subr.bf16.mxu0 0
        %769 = vmatpush2.bf16.msra.mxu0 0
        %770 = vmatprep.subr.bf16.mxu0 0
        %771 = vmatpush2.bf16.msra.mxu0 0
        %772 = vmatprep.subr.bf16.mxu0 0
        %773 = vmatpush2.bf16.msra.mxu0 0
        %774 = vmatprep.subr.bf16.mxu0 0
        %775 = vmatpush2.bf16.msra.mxu0 0
        %776 = vmatprep.subr.bf16.mxu0 0
        %777 = vmatpush2.bf16.msra.mxu0 0
        %778 = vmatprep.subr.bf16.mxu0 0
        %779 = vmatpush2.bf16.msra.mxu0 0
        %780 = vmatprep.subr.bf16.mxu0 0
        %781 = vmatpush2.bf16.msra.mxu0 0
        %782 = vmatprep.mubr.bf16.mxu0 0
        %783 = vmatmul.mubr.bf16.gmra.mxu0 %v745
        %v784 = vpop.f32.mrf.mxu0
        %v785 = vadd.f32 0.0, %v784
        %v786 = vpop.f32.mrf.mxu0
        %v787 = vpop.f32.mrf.mxu0
        %v788 = vadd.f32 0.0, %v787
        %v789 = vpop.f32.mrf.mxu0
        %790 = vmatprep.mubr.bf16.mxu0 0
        %791 = vmatmul.mubr.bf16.gmra.mxu0 %v748
        %v792 = vpop.f32.mrf.mxu0
        %v793 = vadd.f32 0.0, %v792
        %v794 = vpop.f32.mrf.mxu0
        %v795 = vpop.f32.mrf.mxu0
        %v796 = vadd.f32 0.0, %v795
        %v797 = vpop.f32.mrf.mxu0
        %798 = vdwg.mxu0
        %v799 = vmul.f32 %v785, %v345
        %v800 = vmul.f32 %v788, %v345
        %v801 = vmul.f32 %v793, %v345
        %v802 = vmul.f32 %v796, %v345
        %v803 = vadd.f32 %v799, %v355
        %v804 = vadd.f32 %v800, %v355
        %v805 = vadd.f32 %v801, %v355
        %v806 = vadd.f32 %v802, %v355
        %v807 = vmax.f32 %v803, 0.0
        %v808 = vmax.f32 %v804, 0.0
        %v809 = vmax.f32 %v805, 0.0
        %v810 = vmax.f32 %v806, 0.0
        %v811 = vsel %vm365, %v807, 0.0
        %v812 = vrot.slane %v811, 4
        %v813 = vadd.f32 %v811, %v812
        %v814 = vrot.slane %v813, 2
        %v815 = vadd.f32 %v813, %v814
        %v816 = vrot.slane %v815, 1
        %v817 = vadd.f32 %v815, %v816
        %v818 = vsel %vm365, %v808, 0.0
        %v819 = vrot.slane %v818, 4
        %v820 = vadd.f32 %v818, %v819
        %v821 = vrot.slane %v820, 2
        %v822 = vadd.f32 %v820, %v821
        %v823 = vrot.slane %v822, 1
        %v824 = vadd.f32 %v822, %v823
        %v825 = vsel %vm365, %v809, 0.0
        %v826 = vrot.slane %v825, 4
        %v827 = vadd.f32 %v825, %v826
        %v828 = vrot.slane %v827, 2
        %v829 = vadd.f32 %v827, %v828
        %v830 = vrot.slane %v829, 1
        %v831 = vadd.f32 %v829, %v830
        %v832 = vsel %vm365, %v810, 0.0
        %v833 = vrot.slane %v832, 4
        %v834 = vadd.f32 %v832, %v833
        %v835 = vrot.slane %v834, 2
        %v836 = vadd.f32 %v834, %v835
        %v837 = vrot.slane %v836, 1
        %v838 = vadd.f32 %v836, %v837
        %v839 = vmul.f32 %v817, %v394
        %v840 = vmul.f32 %v824, %v394
        %v841 = vmul.f32 %v831, %v394
        %v842 = vmul.f32 %v838, %v394
        %s843 = scalar_lea.vmem %s199, 128
        %v844 = vld [vmem:[%s843] sm:$0xf]
        %v845 = vld [vmem:[%s843 + $0x4] sm:$0xf]
        %v846 = vld [vmem:[%s843 + $0x8] sm:$0xf]
        %v847 = vld [vmem:[%s843 + $0xc] sm:$0xf]
        %v848 = vld [vmem:[%s843 + $0x10] sm:$0xf]
        %v849 = vld [vmem:[%s843 + $0x14] sm:$0xf]
        %v850 = vld [vmem:[%s843 + $0x18] sm:$0xf]
        %v851 = vld [vmem:[%s843 + $0x1c] sm:$0xf]
        %v860 = vunpack.c.l.b16 %v844
        %v861 = vunpack.c.l.b16 %v845
        %v862 = vunpack.c.l.b16 %v846
        %v863 = vunpack.c.l.b16 %v847
        %v864 = vunpack.c.l.b16 %v848
        %v865 = vunpack.c.l.b16 %v849
        %v866 = vunpack.c.l.b16 %v850
        %v867 = vunpack.c.l.b16 %v851
        %v868 = vpack.c.b16 %v861, %v860
        %v869 = vpack.c.b16 %v863, %v862
        %v870 = vpack.c.b16 %v865, %v864
        %v871 = vpack.c.b16 %v867, %v866
        %876 = vxpose.xlu0.c.b16.start [1/8] %v868, 128
        %877 = vxpose.xlu0.c.b16.cont [2/8] %v869, 128
        %878 = vxpose.xlu0.c.b16.cont [3/8] %v870, 128
        %879 = vxpose.xlu0.c.b16.cont [4/8] %v871, 128
        %880 = vxpose.xlu0.c.b16.cont [5/8] 0, 128
        %881 = vxpose.xlu0.c.b16.cont [6/8] 0, 128
        %882 = vxpose.xlu0.c.b16.cont [7/8] 0, 128
        %883 = vxpose.xlu0.c.b16.end [8/8] 0, 128
        %v884 = vpop.trf.xlu0
        %v885 = vpop.trf.xlu0
        %v886 = vpop.trf.xlu0
        %v887 = vpop.trf.xlu0
        %v888 = vpop.trf.xlu0
        %v889 = vpop.trf.xlu0
        %v890 = vpop.trf.xlu0
        %v891 = vpop.trf.xlu0
        %v893 = vsel %vm285, %v884, 0
        %v896 = vsel %vm285, %v885, 0
        %898 = vmatprep.subr.bf16.mxu0 0
        %899 = vmatpush1.bf16.msra.mxu0 0
        %900 = vmatprep.subr.bf16.mxu0 0
        %901 = vmatpush1.bf16.msra.mxu0 0
        %902 = vmatprep.subr.bf16.mxu0 0
        %903 = vmatpush1.bf16.msra.mxu0 0
        %904 = vmatprep.subr.bf16.mxu0 0
        %905 = vmatpush1.bf16.msra.mxu0 0
        %906 = vmatprep.subr.bf16.mxu0 0
        %907 = vmatpush1.bf16.msra.mxu0 %v280
        %908 = vmatprep.subr.bf16.mxu0 0
        %909 = vmatpush1.bf16.msra.mxu0 %v279
        %910 = vmatprep.subr.bf16.mxu0 0
        %911 = vmatpush1.bf16.msra.mxu0 %v278
        %912 = vmatprep.subr.bf16.mxu0 0
        %913 = vmatpush1.bf16.msra.mxu0 %v277
        %914 = vmatprep.subr.bf16.mxu0 0
        %915 = vmatpush2.bf16.msra.mxu0 0
        %916 = vmatprep.subr.bf16.mxu0 0
        %917 = vmatpush2.bf16.msra.mxu0 0
        %918 = vmatprep.subr.bf16.mxu0 0
        %919 = vmatpush2.bf16.msra.mxu0 0
        %920 = vmatprep.subr.bf16.mxu0 0
        %921 = vmatpush2.bf16.msra.mxu0 0
        %922 = vmatprep.subr.bf16.mxu0 0
        %923 = vmatpush2.bf16.msra.mxu0 0
        %924 = vmatprep.subr.bf16.mxu0 0
        %925 = vmatpush2.bf16.msra.mxu0 0
        %926 = vmatprep.subr.bf16.mxu0 0
        %927 = vmatpush2.bf16.msra.mxu0 0
        %928 = vmatprep.subr.bf16.mxu0 0
        %929 = vmatpush2.bf16.msra.mxu0 0
        %930 = vmatprep.mubr.bf16.mxu0 0
        %931 = vmatmul.mubr.bf16.gmra.mxu0 %v893
        %v932 = vpop.f32.mrf.mxu0
        %v933 = vadd.f32 0.0, %v932
        %v934 = vpop.f32.mrf.mxu0
        %v935 = vpop.f32.mrf.mxu0
        %v936 = vadd.f32 0.0, %v935
        %v937 = vpop.f32.mrf.mxu0
        %938 = vmatprep.mubr.bf16.mxu0 0
        %939 = vmatmul.mubr.bf16.gmra.mxu0 %v896
        %v940 = vpop.f32.mrf.mxu0
        %v941 = vadd.f32 0.0, %v940
        %v942 = vpop.f32.mrf.mxu0
        %v943 = vpop.f32.mrf.mxu0
        %v944 = vadd.f32 0.0, %v943
        %v945 = vpop.f32.mrf.mxu0
        %946 = vdwg.mxu0
        %v947 = vmul.f32 %v933, %v345
        %v948 = vmul.f32 %v936, %v345
        %v949 = vmul.f32 %v941, %v345
        %v950 = vmul.f32 %v944, %v345
        %v951 = vadd.f32 %v947, %v355
        %v952 = vadd.f32 %v948, %v355
        %v953 = vadd.f32 %v949, %v355
        %v954 = vadd.f32 %v950, %v355
        %v955 = vmax.f32 %v951, 0.0
        %v956 = vmax.f32 %v952, 0.0
        %v957 = vmax.f32 %v953, 0.0
        %v958 = vmax.f32 %v954, 0.0
        %v959 = vsel %vm365, %v955, 0.0
        %v960 = vrot.slane %v959, 4
        %v961 = vadd.f32 %v959, %v960
        %v962 = vrot.slane %v961, 2
        %v963 = vadd.f32 %v961, %v962
        %v964 = vrot.slane %v963, 1
        %v965 = vadd.f32 %v963, %v964
        %v966 = vsel %vm365, %v956, 0.0
        %v967 = vrot.slane %v966, 4
        %v968 = vadd.f32 %v966, %v967
        %v969 = vrot.slane %v968, 2
        %v970 = vadd.f32 %v968, %v969
        %v971 = vrot.slane %v970, 1
        %v972 = vadd.f32 %v970, %v971
        %v973 = vsel %vm365, %v957, 0.0
        %v974 = vrot.slane %v973, 4
        %v975 = vadd.f32 %v973, %v974
        %v976 = vrot.slane %v975, 2
        %v977 = vadd.f32 %v975, %v976
        %v978 = vrot.slane %v977, 1
        %v979 = vadd.f32 %v977, %v978
        %v980 = vsel %vm365, %v958, 0.0
        %v981 = vrot.slane %v980, 4
        %v982 = vadd.f32 %v980, %v981
        %v983 = vrot.slane %v982, 2
        %v984 = vadd.f32 %v982, %v983
        %v985 = vrot.slane %v984, 1
        %v986 = vadd.f32 %v984, %v985
        %v987 = vmul.f32 %v965, %v394
        %v988 = vmul.f32 %v972, %v394
        %v989 = vmul.f32 %v979, %v394
        %v990 = vmul.f32 %v986, %v394
        %s991 = scalar_lea.vmem %s199, 160
        %v992 = vld [vmem:[%s991] sm:$0xf]
        %v993 = vld [vmem:[%s991 + $0x4] sm:$0xf]
        %v994 = vld [vmem:[%s991 + $0x8] sm:$0xf]
        %v995 = vld [vmem:[%s991 + $0xc] sm:$0xf]
        %v996 = vld [vmem:[%s991 + $0x10] sm:$0xf]
        %v997 = vld [vmem:[%s991 + $0x14] sm:$0xf]
        %v998 = vld [vmem:[%s991 + $0x18] sm:$0xf]
        %v999 = vld [vmem:[%s991 + $0x1c] sm:$0xf]
        %v1008 = vunpack.c.l.b16 %v992
        %v1009 = vunpack.c.l.b16 %v993
        %v1010 = vunpack.c.l.b16 %v994
        %v1011 = vunpack.c.l.b16 %v995
        %v1012 = vunpack.c.l.b16 %v996
        %v1013 = vunpack.c.l.b16 %v997
        %v1014 = vunpack.c.l.b16 %v998
        %v1015 = vunpack.c.l.b16 %v999
        %v1016 = vpack.c.b16 %v1009, %v1008
        %v1017 = vpack.c.b16 %v1011, %v1010
        %v1018 = vpack.c.b16 %v1013, %v1012
        %v1019 = vpack.c.b16 %v1015, %v1014
        %1024 = vxpose.xlu0.c.b16.start [1/8] %v1016, 128
        %1025 = vxpose.xlu0.c.b16.cont [2/8] %v1017, 128
        %1026 = vxpose.xlu0.c.b16.cont [3/8] %v1018, 128
        %1027 = vxpose.xlu0.c.b16.cont [4/8] %v1019, 128
        %1028 = vxpose.xlu0.c.b16.cont [5/8] 0, 128
        %1029 = vxpose.xlu0.c.b16.cont [6/8] 0, 128
        %1030 = vxpose.xlu0.c.b16.cont [7/8] 0, 128
        %1031 = vxpose.xlu0.c.b16.end [8/8] 0, 128
        %v1032 = vpop.trf.xlu0
        %v1033 = vpop.trf.xlu0
        %v1034 = vpop.trf.xlu0
        %v1035 = vpop.trf.xlu0
        %v1036 = vpop.trf.xlu0
        %v1037 = vpop.trf.xlu0
        %v1038 = vpop.trf.xlu0
        %v1039 = vpop.trf.xlu0
        %v1041 = vsel %vm285, %v1032, 0
        %v1044 = vsel %vm285, %v1033, 0
        %1046 = vmatprep.subr.bf16.mxu0 0
        %1047 = vmatpush1.bf16.msra.mxu0 0
        %1048 = vmatprep.subr.bf16.mxu0 0
        %1049 = vmatpush1.bf16.msra.mxu0 0
        %1050 = vmatprep.subr.bf16.mxu0 0
        %1051 = vmatpush1.bf16.msra.mxu0 0
        %1052 = vmatprep.subr.bf16.mxu0 0
        %1053 = vmatpush1.bf16.msra.mxu0 0
        %1054 = vmatprep.subr.bf16.mxu0 0
        %1055 = vmatpush1.bf16.msra.mxu0 %v280
        %1056 = vmatprep.subr.bf16.mxu0 0
        %1057 = vmatpush1.bf16.msra.mxu0 %v279
        %1058 = vmatprep.subr.bf16.mxu0 0
        %1059 = vmatpush1.bf16.msra.mxu0 %v278
        %1060 = vmatprep.subr.bf16.mxu0 0
        %1061 = vmatpush1.bf16.msra.mxu0 %v277
        %1062 = vmatprep.subr.bf16.mxu0 0
        %1063 = vmatpush2.bf16.msra.mxu0 0
        %1064 = vmatprep.subr.bf16.mxu0 0
        %1065 = vmatpush2.bf16.msra.mxu0 0
        %1066 = vmatprep.subr.bf16.mxu0 0
        %1067 = vmatpush2.bf16.msra.mxu0 0
        %1068 = vmatprep.subr.bf16.mxu0 0
        %1069 = vmatpush2.bf16.msra.mxu0 0
        %1070 = vmatprep.subr.bf16.mxu0 0
        %1071 = vmatpush2.bf16.msra.mxu0 0
        %1072 = vmatprep.subr.bf16.mxu0 0
        %1073 = vmatpush2.bf16.msra.mxu0 0
        %1074 = vmatprep.subr.bf16.mxu0 0
        %1075 = vmatpush2.bf16.msra.mxu0 0
        %1076 = vmatprep.subr.bf16.mxu0 0
        %1077 = vmatpush2.bf16.msra.mxu0 0
        %1078 = vmatprep.mubr.bf16.mxu0 0
        %1079 = vmatmul.mubr.bf16.gmra.mxu0 %v1041
        %v1080 = vpop.f32.mrf.mxu0
        %v1081 = vadd.f32 0.0, %v1080
        %v1082 = vpop.f32.mrf.mxu0
        %v1083 = vpop.f32.mrf.mxu0
        %v1084 = vadd.f32 0.0, %v1083
        %v1085 = vpop.f32.mrf.mxu0
        %1086 = vmatprep.mubr.bf16.mxu0 0
        %1087 = vmatmul.mubr.bf16.gmra.mxu0 %v1044
        %v1088 = vpop.f32.mrf.mxu0
        %v1089 = vadd.f32 0.0, %v1088
        %v1090 = vpop.f32.mrf.mxu0
        %v1091 = vpop.f32.mrf.mxu0
        %v1092 = vadd.f32 0.0, %v1091
        %v1093 = vpop.f32.mrf.mxu0
        %1094 = vdwg.mxu0
        %v1095 = vmul.f32 %v1081, %v345
        %v1096 = vmul.f32 %v1084, %v345
        %v1097 = vmul.f32 %v1089, %v345
        %v1098 = vmul.f32 %v1092, %v345
        %v1099 = vadd.f32 %v1095, %v355
        %v1100 = vadd.f32 %v1096, %v355
        %v1101 = vadd.f32 %v1097, %v355
        %v1102 = vadd.f32 %v1098, %v355
        %v1103 = vmax.f32 %v1099, 0.0
        %v1104 = vmax.f32 %v1100, 0.0
        %v1105 = vmax.f32 %v1101, 0.0
        %v1106 = vmax.f32 %v1102, 0.0
        %v1107 = vsel %vm365, %v1103, 0.0
        %v1108 = vrot.slane %v1107, 4
        %v1109 = vadd.f32 %v1107, %v1108
        %v1110 = vrot.slane %v1109, 2
        %v1111 = vadd.f32 %v1109, %v1110
        %v1112 = vrot.slane %v1111, 1
        %v1113 = vadd.f32 %v1111, %v1112
        %v1114 = vsel %vm365, %v1104, 0.0
        %v1115 = vrot.slane %v1114, 4
        %v1116 = vadd.f32 %v1114, %v1115
        %v1117 = vrot.slane %v1116, 2
        %v1118 = vadd.f32 %v1116, %v1117
        %v1119 = vrot.slane %v1118, 1
        %v1120 = vadd.f32 %v1118, %v1119
        %v1121 = vsel %vm365, %v1105, 0.0
        %v1122 = vrot.slane %v1121, 4
        %v1123 = vadd.f32 %v1121, %v1122
        %v1124 = vrot.slane %v1123, 2
        %v1125 = vadd.f32 %v1123, %v1124
        %v1126 = vrot.slane %v1125, 1
        %v1127 = vadd.f32 %v1125, %v1126
        %v1128 = vsel %vm365, %v1106, 0.0
        %v1129 = vrot.slane %v1128, 4
        %v1130 = vadd.f32 %v1128, %v1129
        %v1131 = vrot.slane %v1130, 2
        %v1132 = vadd.f32 %v1130, %v1131
        %v1133 = vrot.slane %v1132, 1
        %v1134 = vadd.f32 %v1132, %v1133
        %v1135 = vmul.f32 %v1113, %v394
        %v1136 = vmul.f32 %v1120, %v394
        %v1137 = vmul.f32 %v1127, %v394
        %v1138 = vmul.f32 %v1134, %v394
        %s1139 = scalar_lea.vmem %s199, 192
        %v1140 = vld [vmem:[%s1139] sm:$0xf]
        %v1141 = vld [vmem:[%s1139 + $0x4] sm:$0xf]
        %v1142 = vld [vmem:[%s1139 + $0x8] sm:$0xf]
        %v1143 = vld [vmem:[%s1139 + $0xc] sm:$0xf]
        %v1144 = vld [vmem:[%s1139 + $0x10] sm:$0xf]
        %v1145 = vld [vmem:[%s1139 + $0x14] sm:$0xf]
        %v1146 = vld [vmem:[%s1139 + $0x18] sm:$0xf]
        %v1147 = vld [vmem:[%s1139 + $0x1c] sm:$0xf]
        %v1156 = vunpack.c.l.b16 %v1140
        %v1157 = vunpack.c.l.b16 %v1141
        %v1158 = vunpack.c.l.b16 %v1142
        %v1159 = vunpack.c.l.b16 %v1143
        %v1160 = vunpack.c.l.b16 %v1144
        %v1161 = vunpack.c.l.b16 %v1145
        %v1162 = vunpack.c.l.b16 %v1146
        %v1163 = vunpack.c.l.b16 %v1147
        %v1164 = vpack.c.b16 %v1157, %v1156
        %v1165 = vpack.c.b16 %v1159, %v1158
        %v1166 = vpack.c.b16 %v1161, %v1160
        %v1167 = vpack.c.b16 %v1163, %v1162
        %1172 = vxpose.xlu0.c.b16.start [1/8] %v1164, 128
        %1173 = vxpose.xlu0.c.b16.cont [2/8] %v1165, 128
        %1174 = vxpose.xlu0.c.b16.cont [3/8] %v1166, 128
        %1175 = vxpose.xlu0.c.b16.cont [4/8] %v1167, 128
        %1176 = vxpose.xlu0.c.b16.cont [5/8] 0, 128
        %1177 = vxpose.xlu0.c.b16.cont [6/8] 0, 128
        %1178 = vxpose.xlu0.c.b16.cont [7/8] 0, 128
        %1179 = vxpose.xlu0.c.b16.end [8/8] 0, 128
        %v1180 = vpop.trf.xlu0
        %v1181 = vpop.trf.xlu0
        %v1182 = vpop.trf.xlu0
        %v1183 = vpop.trf.xlu0
        %v1184 = vpop.trf.xlu0
        %v1185 = vpop.trf.xlu0
        %v1186 = vpop.trf.xlu0
        %v1187 = vpop.trf.xlu0
        %v1189 = vsel %vm285, %v1180, 0
        %v1192 = vsel %vm285, %v1181, 0
        %1194 = vmatprep.subr.bf16.mxu0 0
        %1195 = vmatpush1.bf16.msra.mxu0 0
        %1196 = vmatprep.subr.bf16.mxu0 0
        %1197 = vmatpush1.bf16.msra.mxu0 0
        %1198 = vmatprep.subr.bf16.mxu0 0
        %1199 = vmatpush1.bf16.msra.mxu0 0
        %1200 = vmatprep.subr.bf16.mxu0 0
        %1201 = vmatpush1.bf16.msra.mxu0 0
        %1202 = vmatprep.subr.bf16.mxu0 0
        %1203 = vmatpush1.bf16.msra.mxu0 %v280
        %1204 = vmatprep.subr.bf16.mxu0 0
        %1205 = vmatpush1.bf16.msra.mxu0 %v279
        %1206 = vmatprep.subr.bf16.mxu0 0
        %1207 = vmatpush1.bf16.msra.mxu0 %v278
        %1208 = vmatprep.subr.bf16.mxu0 0
        %1209 = vmatpush1.bf16.msra.mxu0 %v277
        %1210 = vmatprep.subr.bf16.mxu0 0
        %1211 = vmatpush2.bf16.msra.mxu0 0
        %1212 = vmatprep.subr.bf16.mxu0 0
        %1213 = vmatpush2.bf16.msra.mxu0 0
        %1214 = vmatprep.subr.bf16.mxu0 0
        %1215 = vmatpush2.bf16.msra.mxu0 0
        %1216 = vmatprep.subr.bf16.mxu0 0
        %1217 = vmatpush2.bf16.msra.mxu0 0
        %1218 = vmatprep.subr.bf16.mxu0 0
        %1219 = vmatpush2.bf16.msra.mxu0 0
        %1220 = vmatprep.subr.bf16.mxu0 0
        %1221 = vmatpush2.bf16.msra.mxu0 0
        %1222 = vmatprep.subr.bf16.mxu0 0
        %1223 = vmatpush2.bf16.msra.mxu0 0
        %1224 = vmatprep.subr.bf16.mxu0 0
        %1225 = vmatpush2.bf16.msra.mxu0 0
        %1226 = vmatprep.mubr.bf16.mxu0 0
        %1227 = vmatmul.mubr.bf16.gmra.mxu0 %v1189
        %v1228 = vpop.f32.mrf.mxu0
        %v1229 = vadd.f32 0.0, %v1228
        %v1230 = vpop.f32.mrf.mxu0
        %v1231 = vpop.f32.mrf.mxu0
        %v1232 = vadd.f32 0.0, %v1231
        %v1233 = vpop.f32.mrf.mxu0
        %1234 = vmatprep.mubr.bf16.mxu0 0
        %1235 = vmatmul.mubr.bf16.gmra.mxu0 %v1192
        %v1236 = vpop.f32.mrf.mxu0
        %v1237 = vadd.f32 0.0, %v1236
        %v1238 = vpop.f32.mrf.mxu0
        %v1239 = vpop.f32.mrf.mxu0
        %v1240 = vadd.f32 0.0, %v1239
        %v1241 = vpop.f32.mrf.mxu0
        %1242 = vdwg.mxu0
        %v1243 = vmul.f32 %v1229, %v345
        %v1244 = vmul.f32 %v1232, %v345
        %v1245 = vmul.f32 %v1237, %v345
        %v1246 = vmul.f32 %v1240, %v345
        %v1247 = vadd.f32 %v1243, %v355
        %v1248 = vadd.f32 %v1244, %v355
        %v1249 = vadd.f32 %v1245, %v355
        %v1250 = vadd.f32 %v1246, %v355
        %v1251 = vmax.f32 %v1247, 0.0
        %v1252 = vmax.f32 %v1248, 0.0
        %v1253 = vmax.f32 %v1249, 0.0
        %v1254 = vmax.f32 %v1250, 0.0
        %v1255 = vsel %vm365, %v1251, 0.0
        %v1256 = vrot.slane %v1255, 4
        %v1257 = vadd.f32 %v1255, %v1256
        %v1258 = vrot.slane %v1257, 2
        %v1259 = vadd.f32 %v1257, %v1258
        %v1260 = vrot.slane %v1259, 1
        %v1261 = vadd.f32 %v1259, %v1260
        %v1262 = vsel %vm365, %v1252, 0.0
        %v1263 = vrot.slane %v1262, 4
        %v1264 = vadd.f32 %v1262, %v1263
        %v1265 = vrot.slane %v1264, 2
        %v1266 = vadd.f32 %v1264, %v1265
        %v1267 = vrot.slane %v1266, 1
        %v1268 = vadd.f32 %v1266, %v1267
        %v1269 = vsel %vm365, %v1253, 0.0
        %v1270 = vrot.slane %v1269, 4
        %v1271 = vadd.f32 %v1269, %v1270
        %v1272 = vrot.slane %v1271, 2
        %v1273 = vadd.f32 %v1271, %v1272
        %v1274 = vrot.slane %v1273, 1
        %v1275 = vadd.f32 %v1273, %v1274
        %v1276 = vsel %vm365, %v1254, 0.0
        %v1277 = vrot.slane %v1276, 4
        %v1278 = vadd.f32 %v1276, %v1277
        %v1279 = vrot.slane %v1278, 2
        %v1280 = vadd.f32 %v1278, %v1279
        %v1281 = vrot.slane %v1280, 1
        %v1282 = vadd.f32 %v1280, %v1281
        %v1283 = vmul.f32 %v1261, %v394
        %v1284 = vmul.f32 %v1268, %v394
        %v1285 = vmul.f32 %v1275, %v394
        %v1286 = vmul.f32 %v1282, %v394
        %s1287 = scalar_lea.vmem %s199, 224
        %v1288 = vld [vmem:[%s1287] sm:$0xf]
        %v1289 = vld [vmem:[%s1287 + $0x4] sm:$0xf]
        %v1290 = vld [vmem:[%s1287 + $0x8] sm:$0xf]
        %v1291 = vld [vmem:[%s1287 + $0xc] sm:$0xf]
        %v1292 = vld [vmem:[%s1287 + $0x10] sm:$0xf]
        %v1293 = vld [vmem:[%s1287 + $0x14] sm:$0xf]
        %v1294 = vld [vmem:[%s1287 + $0x18] sm:$0xf]
        %v1295 = vld [vmem:[%s1287 + $0x1c] sm:$0xf]
        %v1304 = vunpack.c.l.b16 %v1288
        %v1305 = vunpack.c.l.b16 %v1289
        %v1306 = vunpack.c.l.b16 %v1290
        %v1307 = vunpack.c.l.b16 %v1291
        %v1308 = vunpack.c.l.b16 %v1292
        %v1309 = vunpack.c.l.b16 %v1293
        %v1310 = vunpack.c.l.b16 %v1294
        %v1311 = vunpack.c.l.b16 %v1295
        %v1312 = vpack.c.b16 %v1305, %v1304
        %v1313 = vpack.c.b16 %v1307, %v1306
        %v1314 = vpack.c.b16 %v1309, %v1308
        %v1315 = vpack.c.b16 %v1311, %v1310
        %1320 = vxpose.xlu0.c.b16.start [1/8] %v1312, 128
        %1321 = vxpose.xlu0.c.b16.cont [2/8] %v1313, 128
        %1322 = vxpose.xlu0.c.b16.cont [3/8] %v1314, 128
        %1323 = vxpose.xlu0.c.b16.cont [4/8] %v1315, 128
        %1324 = vxpose.xlu0.c.b16.cont [5/8] 0, 128
        %1325 = vxpose.xlu0.c.b16.cont [6/8] 0, 128
        %1326 = vxpose.xlu0.c.b16.cont [7/8] 0, 128
        %1327 = vxpose.xlu0.c.b16.end [8/8] 0, 128
        %v1328 = vpop.trf.xlu0
        %v1329 = vpop.trf.xlu0
        %v1330 = vpop.trf.xlu0
        %v1331 = vpop.trf.xlu0
        %v1332 = vpop.trf.xlu0
        %v1333 = vpop.trf.xlu0
        %v1334 = vpop.trf.xlu0
        %v1335 = vpop.trf.xlu0
        %v1337 = vsel %vm285, %v1328, 0
        %v1340 = vsel %vm285, %v1329, 0
        %1342 = vmatprep.subr.bf16.mxu0 0
        %1343 = vmatpush1.bf16.msra.mxu0 0
        %1344 = vmatprep.subr.bf16.mxu0 0
        %1345 = vmatpush1.bf16.msra.mxu0 0
        %1346 = vmatprep.subr.bf16.mxu0 0
        %1347 = vmatpush1.bf16.msra.mxu0 0
        %1348 = vmatprep.subr.bf16.mxu0 0
        %1349 = vmatpush1.bf16.msra.mxu0 0
        %1350 = vmatprep.subr.bf16.mxu0 0
        %1351 = vmatpush1.bf16.msra.mxu0 %v280
        %1352 = vmatprep.subr.bf16.mxu0 0
        %1353 = vmatpush1.bf16.msra.mxu0 %v279
        %1354 = vmatprep.subr.bf16.mxu0 0
        %1355 = vmatpush1.bf16.msra.mxu0 %v278
        %1356 = vmatprep.subr.bf16.mxu0 0
        %1357 = vmatpush1.bf16.msra.mxu0 %v277
        %1358 = vmatprep.subr.bf16.mxu0 0
        %1359 = vmatpush2.bf16.msra.mxu0 0
        %1360 = vmatprep.subr.bf16.mxu0 0
        %1361 = vmatpush2.bf16.msra.mxu0 0
        %1362 = vmatprep.subr.bf16.mxu0 0
        %1363 = vmatpush2.bf16.msra.mxu0 0
        %1364 = vmatprep.subr.bf16.mxu0 0
        %1365 = vmatpush2.bf16.msra.mxu0 0
        %1366 = vmatprep.subr.bf16.mxu0 0
        %1367 = vmatpush2.bf16.msra.mxu0 0
        %1368 = vmatprep.subr.bf16.mxu0 0
        %1369 = vmatpush2.bf16.msra.mxu0 0
        %1370 = vmatprep.subr.bf16.mxu0 0
        %1371 = vmatpush2.bf16.msra.mxu0 0
        %1372 = vmatprep.subr.bf16.mxu0 0
        %1373 = vmatpush2.bf16.msra.mxu0 0
        %1374 = vmatprep.mubr.bf16.mxu0 0
        %1375 = vmatmul.mubr.bf16.gmra.mxu0 %v1337
        %v1376 = vpop.f32.mrf.mxu0
        %v1377 = vadd.f32 0.0, %v1376
        %v1378 = vpop.f32.mrf.mxu0
        %v1379 = vpop.f32.mrf.mxu0
        %v1380 = vadd.f32 0.0, %v1379
        %v1381 = vpop.f32.mrf.mxu0
        %1382 = vmatprep.mubr.bf16.mxu0 0
        %1383 = vmatmul.mubr.bf16.gmra.mxu0 %v1340
        %v1384 = vpop.f32.mrf.mxu0
        %v1385 = vadd.f32 0.0, %v1384
        %v1386 = vpop.f32.mrf.mxu0
        %v1387 = vpop.f32.mrf.mxu0
        %v1388 = vadd.f32 0.0, %v1387
        %v1389 = vpop.f32.mrf.mxu0
        %1390 = vdwg.mxu0
        %v1391 = vmul.f32 %v1377, %v345
        %v1392 = vmul.f32 %v1380, %v345
        %v1393 = vmul.f32 %v1385, %v345
        %v1394 = vmul.f32 %v1388, %v345
        %v1395 = vadd.f32 %v1391, %v355
        %v1396 = vadd.f32 %v1392, %v355
        %v1397 = vadd.f32 %v1393, %v355
        %v1398 = vadd.f32 %v1394, %v355
        %v1399 = vmax.f32 %v1395, 0.0
        %v1400 = vmax.f32 %v1396, 0.0
        %v1401 = vmax.f32 %v1397, 0.0
        %v1402 = vmax.f32 %v1398, 0.0
        %v1403 = vsel %vm365, %v1399, 0.0
        %v1404 = vrot.slane %v1403, 4
        %v1405 = vadd.f32 %v1403, %v1404
        %v1406 = vrot.slane %v1405, 2
        %v1407 = vadd.f32 %v1405, %v1406
        %v1408 = vrot.slane %v1407, 1
        %v1409 = vadd.f32 %v1407, %v1408
        %v1410 = vsel %vm365, %v1400, 0.0
        %v1411 = vrot.slane %v1410, 4
        %v1412 = vadd.f32 %v1410, %v1411
        %v1413 = vrot.slane %v1412, 2
        %v1414 = vadd.f32 %v1412, %v1413
        %v1415 = vrot.slane %v1414, 1
        %v1416 = vadd.f32 %v1414, %v1415
        %v1417 = vsel %vm365, %v1401, 0.0
        %v1418 = vrot.slane %v1417, 4
        %v1419 = vadd.f32 %v1417, %v1418
        %v1420 = vrot.slane %v1419, 2
        %v1421 = vadd.f32 %v1419, %v1420
        %v1422 = vrot.slane %v1421, 1
        %v1423 = vadd.f32 %v1421, %v1422
        %v1424 = vsel %vm365, %v1402, 0.0
        %v1425 = vrot.slane %v1424, 4
        %v1426 = vadd.f32 %v1424, %v1425
        %v1427 = vrot.slane %v1426, 2
        %v1428 = vadd.f32 %v1426, %v1427
        %v1429 = vrot.slane %v1428, 1
        %v1430 = vadd.f32 %v1428, %v1429
        %v1431 = vmul.f32 %v1409, %v394
        %v1432 = vmul.f32 %v1416, %v394
        %v1433 = vmul.f32 %v1423, %v394
        %v1434 = vmul.f32 %v1430, %v394
        %v1467 = vrot.slane %v396, 7
        %vm1468 = vcmask 1041409
        %v1469 = vsel %vm1468, %v1467, %v395
        %v1470 = vrot.slane %v397, 6
        %vm1471 = vcmask 1042434
        %v1472 = vsel %vm1471, %v1470, %v1469
        %v1473 = vrot.slane %v398, 5
        %vm1474 = vcmask 1043459
        %v1475 = vsel %vm1474, %v1473, %v1472
        %v1476 = vrot.slane %v544, 7
        %v1477 = vsel %vm1468, %v1476, %v543
        %v1478 = vrot.slane %v545, 6
        %v1479 = vsel %vm1471, %v1478, %v1477
        %v1480 = vrot.slane %v546, 5
        %v1481 = vsel %vm1474, %v1480, %v1479
        %v1482 = vrot.slane %v692, 7
        %v1483 = vsel %vm1468, %v1482, %v691
        %v1484 = vrot.slane %v693, 6
        %v1485 = vsel %vm1471, %v1484, %v1483
        %v1486 = vrot.slane %v694, 5
        %v1487 = vsel %vm1474, %v1486, %v1485
        %v1488 = vrot.slane %v840, 7
        %v1489 = vsel %vm1468, %v1488, %v839
        %v1490 = vrot.slane %v841, 6
        %v1491 = vsel %vm1471, %v1490, %v1489
        %v1492 = vrot.slane %v842, 5
        %v1493 = vsel %vm1474, %v1492, %v1491
        %v1494 = vrot.slane %v988, 7
        %v1495 = vsel %vm1468, %v1494, %v987
        %v1496 = vrot.slane %v989, 6
        %v1497 = vsel %vm1471, %v1496, %v1495
        %v1498 = vrot.slane %v990, 5
        %v1499 = vsel %vm1474, %v1498, %v1497
        %v1500 = vrot.slane %v1136, 7
        %v1501 = vsel %vm1468, %v1500, %v1135
        %v1502 = vrot.slane %v1137, 6
        %v1503 = vsel %vm1471, %v1502, %v1501
        %v1504 = vrot.slane %v1138, 5
        %v1505 = vsel %vm1474, %v1504, %v1503
        %v1506 = vrot.slane %v1284, 7
        %v1507 = vsel %vm1468, %v1506, %v1283
        %v1508 = vrot.slane %v1285, 6
        %v1509 = vsel %vm1471, %v1508, %v1507
        %v1510 = vrot.slane %v1286, 5
        %v1511 = vsel %vm1474, %v1510, %v1509
        %v1512 = vrot.slane %v1432, 7
        %v1513 = vsel %vm1468, %v1512, %v1431
        %v1514 = vrot.slane %v1433, 6
        %v1515 = vsel %vm1471, %v1514, %v1513
        %v1516 = vrot.slane %v1434, 5
        %v1517 = vsel %vm1474, %v1516, %v1515
        %vm1526 = vcmask 257024
        %1527 = vst.msk [vmem:[%s193] sm:$0xf] %vm1526, %v1475
        %1528 = vst.msk [vmem:[%s193 + $0x4] sm:$0xf] %vm1526, %v1481
        %1529 = vst.msk [vmem:[%s193 + $0x8] sm:$0xf] %vm1526, %v1487
        %1530 = vst.msk [vmem:[%s193 + $0xc] sm:$0xf] %vm1526, %v1493
        %1531 = vst.msk [vmem:[%s193 + $0x10] sm:$0xf] %vm1526, %v1499
        %1532 = vst.msk [vmem:[%s193 + $0x14] sm:$0xf] %vm1526, %v1505
        %1533 = vst.msk [vmem:[%s193 + $0x18] sm:$0xf] %vm1526, %v1511
        %1534 = vst.msk [vmem:[%s193 + $0x1c] sm:$0xf] %vm1526, %v1517
        %s1535 = sand.u32 %s115, 1
        %s1536 = scalar_lea.sflag [#allocation3], %s1535
        %s1537 = sand.u32 %s115, 1
        %s1538 = smul.addr %s1537, 32
        %s1539 = scalar_lea.vmem [#allocation2], %s1538
        // Predicated region
        $region37: #{tpu_custom_call.1} parent=35 // pred_check
          %p1540 = pneg %p125
        $region38: #{tpu_custom_call.1} parent=35 // pred_check_branch
          %1542 = sbr.rel (%p1540) target = $region40
        $region39: #{tpu_custom_call.1} parent=35 // pred_region
          %s1543 = smul.u32 8, %s18
          %s1545 = ssub.s32 512, 512
          %1546 = vsyncadd %s1536, %s1545
          %s1547 = smul.addr %s1543, 64
          %s1548 = scalar_lea.hbm %s4, %s1547
          %s1549 = sshll.u32 %s1539, 4
          %s1550 = int_to_ptr.vmem [resolvable:$true] %s1549
          %1555 = dma.vmem_to_hbm [thread:$0]  %s1550, 512, %s1548, %s1536, 64, 64, 4
        $region40: #{tpu_custom_call.1} parent=35 // pred_fallthru
          _
      $region36: #{tpu_custom_call.1} parent=5 // pred_fallthru
        _
      %p1556 = scmp.le.s32.totalorder 2, %s13
      // Predicated region
      $region41: #{tpu_custom_call.1} parent=5 // pred_check
        %p1557 = pneg %p1556
      $region42: #{tpu_custom_call.1} parent=5 // pred_check_branch
        %1559 = sbr.rel (%p1557) target = $region44
      $region43: #{tpu_custom_call.1} parent=5 // pred_region
        %s1560 = ssub.s32 %s13, 2
        // Predicated region
        $region45: #{tpu_custom_call.1} parent=43 // pred_check
          %p1561 = pneg %p131
        $region46: #{tpu_custom_call.1} parent=43 // pred_check_branch
          %1563 = sbr.rel (%p1561) target = $region48
        $region47: #{tpu_custom_call.1} parent=43 // pred_region
          %s1564 = sand.u32 %s116, 1
          %s1565 = scalar_lea.sflag [#allocation3], %s1564
          %s1566 = sand.u32 %s116, 1
          %s1567 = smul.addr %s1566, 32
          %s1568 = scalar_lea.vmem [#allocation2], %s1567
          %1569 = dma.done %s1565, 512
        $region48: #{tpu_custom_call.1} parent=43 // pred_fallthru
          _
      $region44: #{tpu_custom_call.1} parent=5 // pred_fallthru
        _
    $region6: #{tpu_custom_call.1} parent=1 // loop_footer
      %s17 = sadd.s32 1, %s13
    $region7: #{tpu_custom_call.1} parent=1 // loop_footer_branch
      %12 = sbr.rel target = $region3
    $region8: #{tpu_custom_call.1} parent=1 // loop_exit
      _
    %1570 = vsyncpa [#allocation3], 1
    %s1571 = scalar_lea.sflag [#allocation3], 1
    %1572 = vsyncpa %s1571, 1

</llo_original>
